<compile_context>
chip_gen: v5e
topology: v5e:2x2
jax: 0.10.0
libtpu: 0.0.40
codegen_flags: <defaults>
</compile_context>

<pallas_src>
import functools

import jax
import jax.numpy as jnp
from jax.experimental import pallas as pl
from jax.experimental.pallas import tpu as pltpu


def _round_up(x, m):
    return (x + m - 1) // m * m


def _conv3x3_sigmoid_kernel(ht_ref, w_ref, b_ref, o_ref, xs_ref, *, F, Wpp, Cin):
    """One halo'd row tile: im2col -> single MXU matmul -> bias -> sigmoid.

    ht_ref : (1, 1, HT, Cin)   halo'd flat rows of the padded pooled image,
                               HT = (TH+2)*Wpp + 8, row-major over (H, Wpp)
    w_ref  : (9*Cin, Cout)     conv weights, tap-major rows (ky*3+kx)*Cin + c
    b_ref  : (1, Cout)         conv bias
    o_ref  : (1, 1, F, Cout)   output rows, F = TH*Wpp (W-pad cols dropped later)
    xs_ref : (F, 9*Cin)        VMEM im2col scratch
    """
    # im2col: column block `tap` of xs is the halo'd tile shifted by
    # ky*Wpp + kx rows.  Wpp % 8 == 0, so the kx == 0 taps are sublane-aligned.
    for tap in range(9):
        ky, kx = divmod(tap, 3)
        off = ky * Wpp + kx
        xs_ref[:, tap * Cin:(tap + 1) * Cin] = ht_ref[0, 0, off:off + F, :]

    # Single K = 9*Cin contraction: the MXU accumulates all 9 taps internally.
    y = jnp.dot(xs_ref[...], w_ref[...], preferred_element_type=jnp.float32)
    y = y + b_ref[...]
    y = 1.0 / (1.0 + jnp.exp(-y))          # sigmoid (exp on the EUP)
    o_ref[0, 0, :, :] = y.astype(o_ref.dtype)


def _vmem_tile_bytes(rows, cols, itemsize=4):
    return _round_up(max(rows, 1), 8) * _round_up(max(cols, 1), 128) * itemsize


def _estimate_vmem(TH, Wpp, Cin, Cout):
    F = TH * Wpp
    HT = (TH + 2) * Wpp + 8
    return (2 * _vmem_tile_bytes(HT, Cin)            # double-buffered input tile
            + 2 * _vmem_tile_bytes(F, Cout)          # double-buffered output tile
            + 2 * _vmem_tile_bytes(9 * Cin, Cout)    # weights
            + 2 * _vmem_tile_bytes(1, Cout)          # bias
            + _vmem_tile_bytes(F, 9 * Cin)           # im2col scratch
            + _vmem_tile_bytes(F, Cout))             # matmul result / epilogue


def _vmem_caps():
    """Return (tile-picking budget, vmem_limit_bytes) for this chip generation."""
    try:
        cap = int(pltpu.get_tpu_info().vmem_capacity_bytes)
    except Exception:
        cap = 64 * 1024 * 1024                       # conservative (v7x per-TC)
    if cap >= 100 * 1024 * 1024:                     # v5e / v6e: 128 MiB VMEM
        return 40 * 1024 * 1024, 64 * 1024 * 1024
    return 20 * 1024 * 1024, 48 * 1024 * 1024        # v7x (64 MiB) / unknown


def _pick_tile_h(N, Hp, Wpp, Cin, Cout, budget):
    # TH must divide Hp; multiples of 8 (or Hp itself) keep blocks (8,128)-legal
    # (F = TH*Wpp is a multiple of 8 regardless, since Wpp % 8 == 0).
    cands = sorted({d for d in range(8, Hp + 1, 8) if Hp % d == 0} | {Hp})
    if N == 1 and len(cands) > 1:
        # keep >= 2 grid steps so both v7x TensorCores get work
        multi = [d for d in cands if Hp // d >= 2]
        cands = multi if multi else cands
    fits = [d for d in cands if _estimate_vmem(d, Wpp, Cin, Cout) <= budget]
    th = max(fits) if fits else min(cands)
    return th, Hp // th


def bbconv_forward(x, w, b, pool_ratio):
    """BBConv.forward: MaxPool2d(pool_ratio) -> Conv2d(3x3, pad=1) -> sigmoid.

    x: (N, Cin, H, W) f32, w: (Cout, Cin, 3, 3), b: (Cout,). Returns NCHW.
    """
    N, Cin, H, W = x.shape
    Cout = w.shape[0]
    p = int(pool_ratio)
    Hp, Wp = H // p, W // p

    # ---- layout glue (XLA): pool in NCHW, then transpose only the pooled map --
    # TODO(synk): fuse the max-pool + NHWC transpose into the kernel by DMAing
    # un-pooled row bands and pooling with jnp.max on the VPU in-kernel.
    xc = x[:, :, :Hp * p, :Wp * p]                                    # MaxPool2d floor
    pooled = xc.reshape(N, Cin, Hp, p, Wp, p).max(axis=(3, 5))        # (N, Cin, Hp, Wp)
    pooled = jnp.transpose(pooled, (0, 2, 3, 1))                      # (N, Hp, Wp, Cin)

    Wpp = _round_up(Wp + 2, 8)                       # sublane-aligned padded width
    padded = jnp.pad(pooled, ((0, 0), (1, 1), (1, Wpp - Wp - 1), (0, 0)))
    flat = padded.reshape(N, (Hp + 2) * Wpp, Cin)
    flat = jnp.pad(flat, ((0, 0), (0, 8), (0, 0)))                    # tail slack rows

    budget, vmem_limit = _vmem_caps()
    TH, num_h = _pick_tile_h(N, Hp, Wpp, Cin, Cout, budget)
    F = TH * Wpp
    HT = (TH + 2) * Wpp + 8
    est = _estimate_vmem(TH, Wpp, Cin, Cout)
    if est > vmem_limit:
        raise ValueError(
            f"BBConv tile needs ~{est >> 20} MiB VMEM > limit {vmem_limit >> 20} MiB; "
            "reduce W / raise pool_ratio or add W tiling.")

    # Overlapping halo'd tiles: tile i = flat rows [i*TH*Wpp, i*TH*Wpp + HT).
    # Only 2*Wpp + 8 rows per tile are duplicated; no in-kernel relocation.
    tiles = jnp.stack(
        [flat[:, i * TH * Wpp:i * TH * Wpp + HT, :] for i in range(num_h)],
        axis=1)                                                       # (N, num_h, HT, Cin)

    # Weights (Cout, Cin, 3, 3) -> tap-major-packed (9*Cin, Cout); bias (1, Cout).
    wt = jnp.transpose(w, (2, 3, 1, 0)).reshape(9 * Cin, Cout)
    bt = b.reshape(1, Cout)

    rows = N * num_h * F
    cost = pl.CostEstimate(
        flops=2 * rows * 9 * Cin * Cout,
        transcendentals=rows * Cout,
        bytes_accessed=4 * (tiles.size + wt.size + bt.size + rows * Cout))

    kernel = functools.partial(_conv3x3_sigmoid_kernel, F=F, Wpp=Wpp, Cin=Cin)
    out = pl.pallas_call(
        kernel,
        out_shape=jax.ShapeDtypeStruct((N, num_h, F, Cout), jnp.float32),
        grid_spec=pltpu.PrefetchScalarGridSpec(
            num_scalar_prefetch=0,
            grid=(N, num_h),
            in_specs=[
                pl.BlockSpec((1, 1, HT, Cin), lambda n, i: (n, i, 0, 0)),
                # weights / bias are grid-constant and tiny here; for large
                # Cin*Cout, pipeline_mode=pl.Buffered(1) would reclaim their
                # double buffer (mainly relevant on v7x's 64 MiB VMEM).
                pl.BlockSpec((9 * Cin, Cout), lambda n, i: (0, 0)),
                pl.BlockSpec((1, Cout), lambda n, i: (0, 0)),
            ],
            out_specs=pl.BlockSpec((1, 1, F, Cout), lambda n, i: (n, i, 0, 0)),
            scratch_shapes=[pltpu.VMEM((F, 9 * Cin), jnp.float32)],
        ),
        compiler_params=pltpu.CompilerParams(
            dimension_semantics=("parallel", "parallel"),
            vmem_limit_bytes=vmem_limit),
        cost_estimate=cost,
    )(tiles, wt, bt)

    # Drop the W-padding columns and return to NCHW.  With true-Cout output this
    # epilogue touches 16x fewer bytes than the old 128-channel-padded tensor.
    out = out.reshape(N, Hp, Wpp, Cout)[:, :, :Wp, :]
    return jnp.transpose(out, (0, 3, 1, 2))


# ------------------------- pure-JAX reference --------------------------------
def _ref_bbconv(x, w, b, pool_ratio):
    N, Cin, H, W = x.shape
    p = int(pool_ratio)
    Hp, Wp = H // p, W // p
    xc = x[:, :, :Hp * p, :Wp * p]
    pooled = xc.reshape(N, Cin, Hp, p, Wp, p).max(axis=(3, 5))
    y = jax.lax.conv_general_dilated(
        pooled, w, window_strides=(1, 1), padding=((1, 1), (1, 1)),
        dimension_numbers=("NCHW", "OIHW", "NCHW"))
    y = y + b[None, :, None, None]
    return jax.nn.sigmoid(y)


if __name__ == "__main__":
    N, Cin, Cout, H, W = 2, 4, 8, 16, 16          # in_feat=4, out_feat=8
    pool_ratio = 2
    # no_grad_state only toggles requires_grad (autograd); no forward effect.

    key = jax.random.PRNGKey(0)
    k1, k2, k3 = jax.random.split(key, 3)
    x = jax.random.normal(k1, (N, Cin, H, W), jnp.float32)
    w = jax.random.normal(k2, (Cout, Cin, 3, 3), jnp.float32) * (2.0 / (Cin * 9)) ** 0.5
    b = 0.1 * jax.random.normal(k3, (Cout,), jnp.float32)

    fwd = jax.jit(functools.partial(bbconv_forward, pool_ratio=pool_ratio))
    out = jax.block_until_ready(fwd(x, w, b))

    ref = _ref_bbconv(x, w, b, pool_ratio)
    assert out.shape == (N, Cout, H // pool_ratio, W // pool_ratio), out.shape
    max_err = float(jnp.max(jnp.abs(out - ref)))
    assert jnp.allclose(out, ref, atol=1e-4, rtol=1e-4), max_err
    print("KERNEL_OK")
</pallas_src>

<mosaic_0001>
module attributes {stable_mosaic.version = 11 : i64} {
  func.func @_conv3x3_sigmoid_kernel(%arg0: i32, %arg1: i32, %arg2: memref<1x1x168x4xf32, #tpu.memory_space<vmem>>, %arg3: memref<36x8xf32, #tpu.memory_space<vmem>>, %arg4: memref<1x8xf32, #tpu.memory_space<vmem>>, %arg5: memref<1x1x128x8xf32, #tpu.memory_space<vmem>>, %arg6: memref<128x36xf32, #tpu.memory_space<vmem>>) attributes {dimension_semantics = [#tpu.dimension_semantics<parallel>, #tpu.dimension_semantics<parallel>], iteration_bounds = array<i64: 2, 1>, scalar_prefetch = 0 : i64, scratch_operands = 1 : i64, tpu.core_type = #tpu.core_type<tc>, window_params = [{transform_indices = @transform_0, window_bounds = array<i64: 1, 1, 168, 4>}, {pipeline_mode = #tpu.pipeline_mode<synchronous>, transform_indices = @transform_1, window_bounds = array<i64: 36, 8>}, {pipeline_mode = #tpu.pipeline_mode<synchronous>, transform_indices = @transform_2, window_bounds = array<i64: 1, 8>}, {transform_indices = @transform_3, window_bounds = array<i64: 1, 1, 128, 8>}]} {
    %c0 = arith.constant 0 : index
    %c0_0 = arith.constant 0 : index
    %c0_1 = arith.constant 0 : index
    %c0_2 = arith.constant 0 : index
    %0 = vector.load %arg2[%c0, %c0_0, %c0_1, %c0_2] : memref<1x1x168x4xf32, #tpu.memory_space<vmem>>, vector<1x1x128x4xf32>
    %1 = vector.shape_cast %0 : vector<1x1x128x4xf32> to vector<128x4xf32>
    %c0_3 = arith.constant 0 : index
    %c0_4 = arith.constant 0 : index
    %2 = vector.load %arg6[%c0_3, %c0_4] : memref<128x36xf32, #tpu.memory_space<vmem>>, vector<128x4xf32>
    tpu.vector_store %arg6[%c0_3, %c0_4], %1 {strides = array<i32>} : memref<128x36xf32, #tpu.memory_space<vmem>>, vector<128x4xf32>,
    %c0_5 = arith.constant 0 : index
    %c0_6 = arith.constant 0 : index
    %c1 = arith.constant 1 : index
    %c0_7 = arith.constant 0 : index
    %3 = vector.load %arg2[%c0_5, %c0_6, %c1, %c0_7] : memref<1x1x168x4xf32, #tpu.memory_space<vmem>>, vector<1x1x128x4xf32>
    %4 = vector.shape_cast %3 : vector<1x1x128x4xf32> to vector<128x4xf32>
    %c0_8 = arith.constant 0 : index
    %c4 = arith.constant 4 : index
    %5 = vector.load %arg6[%c0_8, %c4] : memref<128x36xf32, #tpu.memory_space<vmem>>, vector<128x4xf32>
    tpu.vector_store %arg6[%c0_8, %c4], %4 {strides = array<i32>} : memref<128x36xf32, #tpu.memory_space<vmem>>, vector<128x4xf32>,
    %c0_9 = arith.constant 0 : index
    %c0_10 = arith.constant 0 : index
    %c2 = arith.constant 2 : index
    %c0_11 = arith.constant 0 : index
    %6 = vector.load %arg2[%c0_9, %c0_10, %c2, %c0_11] : memref<1x1x168x4xf32, #tpu.memory_space<vmem>>, vector<1x1x128x4xf32>
    %7 = vector.shape_cast %6 : vector<1x1x128x4xf32> to vector<128x4xf32>
    %c0_12 = arith.constant 0 : index
    %c8 = arith.constant 8 : index
    %8 = vector.load %arg6[%c0_12, %c8] : memref<128x36xf32, #tpu.memory_space<vmem>>, vector<128x4xf32>
    tpu.vector_store %arg6[%c0_12, %c8], %7 {strides = array<i32>} : memref<128x36xf32, #tpu.memory_space<vmem>>, vector<128x4xf32>,
    %c0_13 = arith.constant 0 : index
    %c0_14 = arith.constant 0 : index
    %c16 = arith.constant 16 : index
    %c0_15 = arith.constant 0 : index
    %9 = vector.load %arg2[%c0_13, %c0_14, %c16, %c0_15] : memref<1x1x168x4xf32, #tpu.memory_space<vmem>>, vector<1x1x128x4xf32>
    %10 = vector.shape_cast %9 : vector<1x1x128x4xf32> to vector<128x4xf32>
    %c0_16 = arith.constant 0 : index
    %c12 = arith.constant 12 : index
    %11 = vector.load %arg6[%c0_16, %c12] : memref<128x36xf32, #tpu.memory_space<vmem>>, vector<128x4xf32>
    tpu.vector_store %arg6[%c0_16, %c12], %10 {strides = array<i32>} : memref<128x36xf32, #tpu.memory_space<vmem>>, vector<128x4xf32>,
    %c0_17 = arith.constant 0 : index
    %c0_18 = arith.constant 0 : index
    %c17 = arith.constant 17 : index
    %c0_19 = arith.constant 0 : index
    %12 = vector.load %arg2[%c0_17, %c0_18, %c17, %c0_19] : memref<1x1x168x4xf32, #tpu.memory_space<vmem>>, vector<1x1x128x4xf32>
    %13 = vector.shape_cast %12 : vector<1x1x128x4xf32> to vector<128x4xf32>
    %c0_20 = arith.constant 0 : index
    %c16_21 = arith.constant 16 : index
    %14 = vector.load %arg6[%c0_20, %c16_21] : memref<128x36xf32, #tpu.memory_space<vmem>>, vector<128x4xf32>
    tpu.vector_store %arg6[%c0_20, %c16_21], %13 {strides = array<i32>} : memref<128x36xf32, #tpu.memory_space<vmem>>, vector<128x4xf32>,
    %c0_22 = arith.constant 0 : index
    %c0_23 = arith.constant 0 : index
    %c18 = arith.constant 18 : index
    %c0_24 = arith.constant 0 : index
    %15 = vector.load %arg2[%c0_22, %c0_23, %c18, %c0_24] : memref<1x1x168x4xf32, #tpu.memory_space<vmem>>, vector<1x1x128x4xf32>
    %16 = vector.shape_cast %15 : vector<1x1x128x4xf32> to vector<128x4xf32>
    %c0_25 = arith.constant 0 : index
    %c20 = arith.constant 20 : index
    %17 = vector.load %arg6[%c0_25, %c20] : memref<128x36xf32, #tpu.memory_space<vmem>>, vector<128x4xf32>
    tpu.vector_store %arg6[%c0_25, %c20], %16 {strides = array<i32>} : memref<128x36xf32, #tpu.memory_space<vmem>>, vector<128x4xf32>,
    %c0_26 = arith.constant 0 : index
    %c0_27 = arith.constant 0 : index
    %c32 = arith.constant 32 : index
    %c0_28 = arith.constant 0 : index
    %18 = vector.load %arg2[%c0_26, %c0_27, %c32, %c0_28] : memref<1x1x168x4xf32, #tpu.memory_space<vmem>>, vector<1x1x128x4xf32>
    %19 = vector.shape_cast %18 : vector<1x1x128x4xf32> to vector<128x4xf32>
    %c0_29 = arith.constant 0 : index
    %c24 = arith.constant 24 : index
    %20 = vector.load %arg6[%c0_29, %c24] : memref<128x36xf32, #tpu.memory_space<vmem>>, vector<128x4xf32>
    tpu.vector_store %arg6[%c0_29, %c24], %19 {strides = array<i32>} : memref<128x36xf32, #tpu.memory_space<vmem>>, vector<128x4xf32>,
    %c0_30 = arith.constant 0 : index
    %c0_31 = arith.constant 0 : index
    %c33 = arith.constant 33 : index
    %c0_32 = arith.constant 0 : index
    %21 = vector.load %arg2[%c0_30, %c0_31, %c33, %c0_32] : memref<1x1x168x4xf32, #tpu.memory_space<vmem>>, vector<1x1x128x4xf32>
    %22 = vector.shape_cast %21 : vector<1x1x128x4xf32> to vector<128x4xf32>
    %c0_33 = arith.constant 0 : index
    %c28 = arith.constant 28 : index
    %23 = vector.load %arg6[%c0_33, %c28] : memref<128x36xf32, #tpu.memory_space<vmem>>, vector<128x4xf32>
    tpu.vector_store %arg6[%c0_33, %c28], %22 {strides = array<i32>} : memref<128x36xf32, #tpu.memory_space<vmem>>, vector<128x4xf32>,
    %c0_34 = arith.constant 0 : index
    %c0_35 = arith.constant 0 : index
    %c34 = arith.constant 34 : index
    %c0_36 = arith.constant 0 : index
    %24 = vector.load %arg2[%c0_34, %c0_35, %c34, %c0_36] : memref<1x1x168x4xf32, #tpu.memory_space<vmem>>, vector<1x1x128x4xf32>
    %25 = vector.shape_cast %24 : vector<1x1x128x4xf32> to vector<128x4xf32>
    %c0_37 = arith.constant 0 : index
    %c32_38 = arith.constant 32 : index
    %26 = vector.load %arg6[%c0_37, %c32_38] : memref<128x36xf32, #tpu.memory_space<vmem>>, vector<128x4xf32>
    tpu.vector_store %arg6[%c0_37, %c32_38], %25 {strides = array<i32>} : memref<128x36xf32, #tpu.memory_space<vmem>>, vector<128x4xf32>,
    %c0_39 = arith.constant 0 : index
    %c0_40 = arith.constant 0 : index
    %27 = vector.load %arg6[%c0_39, %c0_40] : memref<128x36xf32, #tpu.memory_space<vmem>>, vector<128x36xf32>
    %c0_41 = arith.constant 0 : index
    %c0_42 = arith.constant 0 : index
    %28 = vector.load %arg3[%c0_41, %c0_42] : memref<36x8xf32, #tpu.memory_space<vmem>>, vector<36x8xf32>
    %cst = arith.constant dense<0.000000e+00> : vector<128x8xf32>
    %29 = tpu.matmul %27, %28, %cst {dimension_numbers = #tpu.dot_dimension_numbers<[1], [0], [0], [1], [0, 0, 1, 1], [], []>} : vector<128x36xf32>, vector<36x8xf32>, vector<128x8xf32> -> vector<128x8xf32>
    %c0_43 = arith.constant 0 : index
    %c0_44 = arith.constant 0 : index
    %30 = vector.load %arg4[%c0_43, %c0_44] : memref<1x8xf32, #tpu.memory_space<vmem>>, vector<1x8xf32>
    %31 = vector.broadcast %30 : vector<1x8xf32> to vector<128x8xf32>
    %32 = arith.addf %29, %31 : vector<128x8xf32>
    %cst_45 = arith.constant 0.000000e+00 : f32
    %33 = vector.broadcast %cst_45 : f32 to vector<128x8xf32>
    %34 = arith.subf %33, %32 : vector<128x8xf32>
    %35 = math.exp %34 : vector<128x8xf32>
    %cst_46 = arith.constant 1.000000e+00 : f32
    %36 = vector.broadcast %cst_46 : f32 to vector<128x8xf32>
    %37 = arith.addf %36, %35 : vector<128x8xf32>
    %cst_47 = arith.constant 1.000000e+00 : f32
    %38 = vector.broadcast %cst_47 : f32 to vector<128x8xf32>
    %39 = arith.divf %38, %37 : vector<128x8xf32>
    %c0_48 = arith.constant 0 : index
    %c0_49 = arith.constant 0 : index
    %c0_50 = arith.constant 0 : index
    %c0_51 = arith.constant 0 : index
    %40 = vector.load %arg5[%c0_48, %c0_49, %c0_50, %c0_51] : memref<1x1x128x8xf32, #tpu.memory_space<vmem>>, vector<1x1x128x8xf32>
    %41 = vector.shape_cast %40 : vector<1x1x128x8xf32> to vector<128x8xf32>
    %42 = vector.shape_cast %39 : vector<128x8xf32> to vector<1x1x128x8xf32>
    tpu.vector_store %arg5[%c0_48, %c0_49, %c0_50, %c0_51], %42 {strides = array<i32>} : memref<1x1x128x8xf32, #tpu.memory_space<vmem>>, vector<1x1x128x8xf32>,
    return
  }
  func.func @transform_0(%arg0: i32, %arg1: i32) -> (i32, i32, i32, i32) {
    %c0_i32 = arith.constant 0 : i32
    %c0_i32_0 = arith.constant 0 : i32
    %c0_i32_1 = arith.constant 0 : i32
    return %arg0, %arg1, %c0_i32, %c0_i32_0 : i32, i32, i32, i32
  }
  func.func @transform_1(%arg0: i32, %arg1: i32) -> (i32, i32) {
    %c0_i32 = arith.constant 0 : i32
    %c0_i32_0 = arith.constant 0 : i32
    %c0_i32_1 = arith.constant 0 : i32
    return %c0_i32, %c0_i32_0 : i32, i32
  }
  func.func @transform_2(%arg0: i32, %arg1: i32) -> (i32, i32) {
    %c0_i32 = arith.constant 0 : i32
    %c0_i32_0 = arith.constant 0 : i32
    %c0_i32_1 = arith.constant 0 : i32
    return %c0_i32, %c0_i32_0 : i32, i32
  }
  func.func @transform_3(%arg0: i32, %arg1: i32) -> (i32, i32, i32, i32) {
    %c0_i32 = arith.constant 0 : i32
    %c0_i32_0 = arith.constant 0 : i32
    %c0_i32_1 = arith.constant 0 : i32
    return %arg0, %arg1, %c0_i32, %c0_i32_0 : i32, i32, i32, i32
  }
}

</mosaic_0001>

<llo_original>
// kernel: bbconv_forward.1
$region0: #{bbconv_forward.1}
  #allocation0 [shape = 'u32[]', space=smem, size = 0x4, offset = 0x4, fixed_abs, tag = 'smem constant byte address 0x4 - core index']
  #allocation1 [shape = 'u32[72,128]{1,0:T(1,128)}', space=vmem, size = 0x9000, scoped, tag = 'internal scratch']
  #allocation2 [shape = 'f32[128,36]{1,0:T(8,128)}', space=vmem, size = 0x10000, scoped, tag = 'scratch operand']
  %s0 = inlined_call_operand.vmem [shape: f32[2,1,168,4], index: 0, kind: input, shape index: {}]
  %s1 = inlined_call_operand.vmem [shape: f32[36,8], index: 1, kind: input, shape index: {}]
  %s2 = inlined_call_operand.vmem [shape: f32[1,8], index: 2, kind: input, shape index: {}]
  %s3 = inlined_call_operand.vmem [shape: f32[2,1,128,8], index: 3, kind: output, shape index: {}]
  %s4 = sld [smem:[#allocation0]]
  $region45: #{bbconv_forward.1} parent=0
    _
  %s6 = ssub.s32 1, %s4
  %s7 = scalar_select 0, %s6, %s4
  loop: start=0, step=1, limit=4
  $region2: #{bbconv_forward.1} parent=0 // loop_pre_header
    _
  $region3: #{bbconv_forward.1} parent=0 // loop_header
    %s9 = sphi 0, %s13
    %p10 = scmp.ge.s32.totalorder %s9, 4
    %s16 = sphi 0, %s28
    %s17 = sphi 0, %s24
    %s18 = sphi 0, %s16
    %s19 = sphi 0, %s17
    %s20 = sphi 0, %s18
    %s21 = sphi 0, %s19
    %s33 = sphi 0, %s35
    %s36 = sphi 0, %s33
    %s37 = sphi 0, %s36
    %s53 = sphi 0, %s37
    %s57 = sphi 0, %s57
    %s59 = sphi 0, %s57
    %s60 = sphi 0, %s59
    %s74 = sphi 0, %s60
    %s78 = sphi 0, %s78
    %s80 = sphi 0, %s78
    %s81 = sphi 0, %s80
    %s95 = sphi 0, %s81
    %s103 = sphi 0, %s105
    %s106 = sphi 0, %s103
    %s107 = sphi 0, %s106
    %s123 = sphi 0, %s107
  $region4: #{bbconv_forward.1} parent=0 // loop_header_branch
    %12 = sbr.rel (%p10) target = $region8
  $region5: #{bbconv_forward.1} parent=0 // loop_body
    %s14 = ssub.s32 %s9, 1
    %s15 = ssub.s32 %s9, 2
    %s22 = sadd.s32 1, %s17
    %p23 = scmp.ge.s32.totalorder %s22, 1
    %s24 = scalar_select %p23, 0, %s22
    %s25 = sadd.s32 1, %s16
    %s26 = scalar_select %p23, %s25, %s16
    %p27 = scmp.ge.s32.totalorder %s26, 2
    %s28 = scalar_select %p27, 0, %s26
    %s29 = ssub.s32 %s16, %s28
    %s30 = ssub.s32 %s17, %s24
    %s31 = sor.u32 %s29, %s30
    %p32 = scmp.eq.s32.totalorder %s31, 0
    %s34 = sadd.s32 %s33, 1
    %s35 = scalar_select %p32, %s33, %s34
    %p38 = pneg %p32
    %p39 = scmp.eq.s32.totalorder %s9, 1
    %p40 = por %p38, %p39
    %p41 = scmp.ne.s32.totalorder %s33, %s36
    %p42 = scmp.eq.s32.totalorder %s9, 0
    %p43 = por %p41, %p42
    %p44 = scmp.ne.s32.totalorder %s33, %s36
    %p45 = scmp.eq.s32.totalorder %s14, 1
    %p46 = por %p44, %p45
    %p47 = scmp.ne.s32.totalorder %s36, %s37
    %p48 = scmp.eq.s32.totalorder %s14, 0
    %p49 = por %p47, %p48
    %p50 = scmp.ne.s32.totalorder %s36, %s37
    %p51 = scmp.eq.s32.totalorder %s15, 1
    %p52 = por %p50, %p51
    %p54 = scmp.ne.s32.totalorder %s37, %s53
    %p55 = scmp.eq.s32.totalorder %s15, 0
    %p56 = por %p54, %p55
    %s58 = sadd.s32 %s57, 1
    %p61 = scmp.eq.s32.totalorder %s9, 1
    %p62 = scmp.ne.s32.totalorder %s57, %s59
    %p63 = scmp.eq.s32.totalorder %s9, 0
    %p64 = por %p62, %p63
    %p65 = scmp.ne.s32.totalorder %s57, %s59
    %p66 = scmp.eq.s32.totalorder %s14, 1
    %p67 = por %p65, %p66
    %p68 = scmp.ne.s32.totalorder %s59, %s60
    %p69 = scmp.eq.s32.totalorder %s14, 0
    %p70 = por %p68, %p69
    %p71 = scmp.ne.s32.totalorder %s59, %s60
    %p72 = scmp.eq.s32.totalorder %s15, 1
    %p73 = por %p71, %p72
    %p75 = scmp.ne.s32.totalorder %s60, %s74
    %p76 = scmp.eq.s32.totalorder %s15, 0
    %p77 = por %p75, %p76
    %s79 = sadd.s32 %s78, 1
    %p82 = scmp.eq.s32.totalorder %s9, 1
    %p83 = scmp.ne.s32.totalorder %s78, %s80
    %p84 = scmp.eq.s32.totalorder %s9, 0
    %p85 = por %p83, %p84
    %p86 = scmp.ne.s32.totalorder %s78, %s80
    %p87 = scmp.eq.s32.totalorder %s14, 1
    %p88 = por %p86, %p87
    %p89 = scmp.ne.s32.totalorder %s80, %s81
    %p90 = scmp.eq.s32.totalorder %s14, 0
    %p91 = por %p89, %p90
    %p92 = scmp.ne.s32.totalorder %s80, %s81
    %p93 = scmp.eq.s32.totalorder %s15, 1
    %p94 = por %p92, %p93
    %p96 = scmp.ne.s32.totalorder %s81, %s95
    %p97 = scmp.eq.s32.totalorder %s15, 0
    %p98 = por %p96, %p97
    %s99 = ssub.s32 %s16, %s28
    %s100 = ssub.s32 %s17, %s24
    %s101 = sor.u32 %s99, %s100
    %p102 = scmp.eq.s32.totalorder %s101, 0
    %s104 = sadd.s32 %s103, 1
    %s105 = scalar_select %p102, %s103, %s104
    %p108 = pneg %p102
    %p109 = scmp.eq.s32.totalorder %s9, 1
    %p110 = por %p108, %p109
    %p111 = scmp.ne.s32.totalorder %s103, %s106
    %p112 = scmp.eq.s32.totalorder %s9, 0
    %p113 = por %p111, %p112
    %p114 = scmp.ne.s32.totalorder %s103, %s106
    %p115 = scmp.eq.s32.totalorder %s14, 1
    %p116 = por %p114, %p115
    %p117 = scmp.ne.s32.totalorder %s106, %s107
    %p118 = scmp.eq.s32.totalorder %s14, 0
    %p119 = por %p117, %p118
    %p120 = scmp.ne.s32.totalorder %s106, %s107
    %p121 = scmp.eq.s32.totalorder %s15, 1
    %p122 = por %p120, %p121
    %p124 = scmp.ne.s32.totalorder %s107, %s123
    %p125 = scmp.eq.s32.totalorder %s15, 0
    %p126 = por %p124, %p125
    %p127 = scmp.le.s32.totalorder 1, %s9
    %p128 = scmp.lt.s32.totalorder %s9, 3
    %p129 = pnand %p127, %p128
    %p130 = pneg %p129
    // Predicated region
    $region9: #{bbconv_forward.1} parent=5 // pred_check
      _
    $region10: #{bbconv_forward.1} parent=5 // pred_check_branch
      %132 = sbr.rel (%p129) target = $region12
    $region11: #{bbconv_forward.1} parent=5 // pred_region
      %s133 = ssub.s32 %s9, 1
      // Predicated region
      $region13: #{bbconv_forward.1} parent=11 // pred_check
        %p134 = pneg %p70
      $region14: #{bbconv_forward.1} parent=11 // pred_check_branch
        %136 = sbr.rel (%p134) target = $region16
      $region15: #{bbconv_forward.1} parent=11 // pred_region
        _
      $region16: #{bbconv_forward.1} parent=11 // pred_fallthru
        _
      // Predicated region
      $region17: #{bbconv_forward.1} parent=11 // pred_check
        %p137 = pneg %p91
      $region18: #{bbconv_forward.1} parent=11 // pred_check_branch
        %139 = sbr.rel (%p137) target = $region20
      $region19: #{bbconv_forward.1} parent=11 // pred_region
        _
      $region20: #{bbconv_forward.1} parent=11 // pred_fallthru
        _
    $region12: #{bbconv_forward.1} parent=5 // pred_fallthru
      _
    %p140 = scmp.lt.s32.totalorder %s9, 2
    // Predicated region
    $region21: #{bbconv_forward.1} parent=5 // pred_check
      %p141 = pneg %p140
    $region22: #{bbconv_forward.1} parent=5 // pred_check_branch
      %143 = sbr.rel (%p141) target = $region24
    $region23: #{bbconv_forward.1} parent=5 // pred_region
      // Predicated region
      $region25: #{bbconv_forward.1} parent=23 // pred_check
        %p144 = pneg %p43
      $region26: #{bbconv_forward.1} parent=23 // pred_check_branch
        %146 = sbr.rel (%p144) target = $region28
      $region27: #{bbconv_forward.1} parent=23 // pred_region
        %p147 = scmp.lt.s32.totalorder %s16, 1
        %s148 = scalar_select %p147, %s16, 1
        %p149 = scmp.lt.s32.totalorder %s17, 0
        %s150 = scalar_select %p149, %s17, 0
        %s151 = smul.addr %s150, 21
        %s152 = smul.addr %s148, 21
        %s153 = sadd.s32 %s151, %s152
        %s154 = smul.addr %s153, 8
        %s155 = scalar_lea.vmem %s0, %s154
      $region28: #{bbconv_forward.1} parent=23 // pred_fallthru
        _
    $region24: #{bbconv_forward.1} parent=5 // pred_fallthru
      _
    %p156 = scmp.le.s32.totalorder 1, %s9
    %p157 = scmp.lt.s32.totalorder %s9, 3
    %p158 = pnand %p156, %p157
    %p159 = pneg %p158
    // Predicated region
    $region29: #{bbconv_forward.1} parent=5 // pred_check
      _
    $region30: #{bbconv_forward.1} parent=5 // pred_check_branch
      %161 = sbr.rel (%p158) target = $region32
    $region31: #{bbconv_forward.1} parent=5 // pred_region
      %s162 = ssub.s32 %s9, 1
      %p163 = scmp.lt.s32.totalorder %s18, 1
      %s164 = scalar_select %p163, %s18, 1
      %p165 = scmp.lt.s32.totalorder %s19, 0
      %s166 = scalar_select %p165, %s19, 0
      %s167 = smul.addr %s166, 21
      %s168 = smul.addr %s164, 21
      %s169 = sadd.s32 %s167, %s168
      %s170 = smul.addr %s169, 8
      %s171 = scalar_lea.vmem %s0, %s170
      %p172 = pneg %p49
      %p173 = pneg %p46
      %p174 = pneg %p70
      %p175 = pneg %p67
      %p176 = pneg %p91
      %p177 = pneg %p88
      %p178 = pneg %p119
      %p179 = pneg %p116
      %p180 = scmp.lt.s32.totalorder %s18, 1
      %s181 = scalar_select %p180, %s18, 1
      %p182 = scmp.lt.s32.totalorder %s19, 0
      %s183 = scalar_select %p182, %s19, 0
      %s184 = smul.addr %s183, 16
      %s185 = smul.addr %s181, 16
      %s186 = sadd.s32 %s184, %s185
      %s187 = smul.addr %s186, 8
      %s188 = scalar_lea.vmem %s3, %s187
      %p189 = scmp.lt.s32.totalorder %s18, 1
      %s190 = scalar_select %p189, %s18, 1
      %p191 = scmp.lt.s32.totalorder %s19, 0
      %s192 = scalar_select %p191, %s19, 0
      %s193 = smul.addr %s192, 21
      %s194 = smul.addr %s190, 21
      %s195 = sadd.s32 %s193, %s194
      %s196 = smul.addr %s195, 8
      %s197 = scalar_lea.vmem %s0, %s196
      %p198 = scmp.lt.s32.totalorder %s18, 1
      %s199 = scalar_select %p198, %s18, 1
      %p200 = scmp.lt.s32.totalorder %s19, 0
      %s201 = scalar_select %p200, %s19, 0
      %s202 = smul.addr %s201, 16
      %s203 = smul.addr %s199, 16
      %s204 = sadd.s32 %s202, %s203
      %s205 = smul.addr %s204, 8
      %s206 = scalar_lea.vmem %s3, %s205
      %v207 = vld [vmem:[%s197] sm:$0xff]
      %v208 = vld [vmem:[%s197 + $0x8] sm:$0xff]
      %v209 = vld [vmem:[%s197 + $0x10] sm:$0xff]
      %v210 = vld [vmem:[%s197 + $0x18] sm:$0xff]
      %v211 = vld [vmem:[%s197 + $0x20] sm:$0xff]
      %v212 = vld [vmem:[%s197 + $0x28] sm:$0xff]
      %v213 = vld [vmem:[%s197 + $0x30] sm:$0xff]
      %v214 = vld [vmem:[%s197 + $0x38] sm:$0xff]
      %v215 = vld [vmem:[%s197 + $0x40] sm:$0xff]
      %v216 = vld [vmem:[%s197 + $0x48] sm:$0xff]
      %v217 = vld [vmem:[%s197 + $0x50] sm:$0xff]
      %v218 = vld [vmem:[%s197 + $0x58] sm:$0xff]
      %v219 = vld [vmem:[%s197 + $0x60] sm:$0xff]
      %v220 = vld [vmem:[%s197 + $0x68] sm:$0xff]
      %v221 = vld [vmem:[%s197 + $0x70] sm:$0xff]
      %v222 = vld [vmem:[%s197 + $0x78] sm:$0xff]
      %vm223 = vcmask 31744
      %224 = vst.msk [vmem:[#allocation2] sm:$0xff] %vm223, %v207
      %225 = vst.msk [vmem:[#allocation2 + $0x8] sm:$0xff] %vm223, %v208
      %226 = vst.msk [vmem:[#allocation2 + $0x10] sm:$0xff] %vm223, %v209
      %227 = vst.msk [vmem:[#allocation2 + $0x18] sm:$0xff] %vm223, %v210
      %228 = vst.msk [vmem:[#allocation2 + $0x20] sm:$0xff] %vm223, %v211
      %229 = vst.msk [vmem:[#allocation2 + $0x28] sm:$0xff] %vm223, %v212
      %230 = vst.msk [vmem:[#allocation2 + $0x30] sm:$0xff] %vm223, %v213
      %231 = vst.msk [vmem:[#allocation2 + $0x38] sm:$0xff] %vm223, %v214
      %232 = vst.msk [vmem:[#allocation2 + $0x40] sm:$0xff] %vm223, %v215
      %233 = vst.msk [vmem:[#allocation2 + $0x48] sm:$0xff] %vm223, %v216
      %234 = vst.msk [vmem:[#allocation2 + $0x50] sm:$0xff] %vm223, %v217
      %235 = vst.msk [vmem:[#allocation2 + $0x58] sm:$0xff] %vm223, %v218
      %236 = vst.msk [vmem:[#allocation2 + $0x60] sm:$0xff] %vm223, %v219
      %237 = vst.msk [vmem:[#allocation2 + $0x68] sm:$0xff] %vm223, %v220
      %238 = vst.msk [vmem:[#allocation2 + $0x70] sm:$0xff] %vm223, %v221
      %239 = vst.msk [vmem:[#allocation2 + $0x78] sm:$0xff] %vm223, %v222
      %v240 = vld [vmem:[%s197 + $0x1] sm:$0xff]
      %v241 = vld [vmem:[%s197 + $0x9] sm:$0xff]
      %v242 = vld [vmem:[%s197 + $0x11] sm:$0xff]
      %v243 = vld [vmem:[%s197 + $0x19] sm:$0xff]
      %v244 = vld [vmem:[%s197 + $0x21] sm:$0xff]
      %v245 = vld [vmem:[%s197 + $0x29] sm:$0xff]
      %v246 = vld [vmem:[%s197 + $0x31] sm:$0xff]
      %v247 = vld [vmem:[%s197 + $0x39] sm:$0xff]
      %v248 = vld [vmem:[%s197 + $0x41] sm:$0xff]
      %v249 = vld [vmem:[%s197 + $0x49] sm:$0xff]
      %v250 = vld [vmem:[%s197 + $0x51] sm:$0xff]
      %v251 = vld [vmem:[%s197 + $0x59] sm:$0xff]
      %v252 = vld [vmem:[%s197 + $0x61] sm:$0xff]
      %v253 = vld [vmem:[%s197 + $0x69] sm:$0xff]
      %v254 = vld [vmem:[%s197 + $0x71] sm:$0xff]
      %v255 = vld [vmem:[%s197 + $0x79] sm:$0xff]
      %272 = vrot.lane.b32.xlu0 %v240, 4
      %v273 = vpop.permute.xlu0 %272
      %274 = vrot.lane.b32.xlu0 %v241, 4
      %v275 = vpop.permute.xlu0 %274
      %276 = vrot.lane.b32.xlu0 %v242, 4
      %v277 = vpop.permute.xlu0 %276
      %278 = vrot.lane.b32.xlu0 %v243, 4
      %v279 = vpop.permute.xlu0 %278
      %280 = vrot.lane.b32.xlu0 %v244, 4
      %v281 = vpop.permute.xlu0 %280
      %282 = vrot.lane.b32.xlu0 %v245, 4
      %v283 = vpop.permute.xlu0 %282
      %284 = vrot.lane.b32.xlu0 %v246, 4
      %v285 = vpop.permute.xlu0 %284
      %286 = vrot.lane.b32.xlu0 %v247, 4
      %v287 = vpop.permute.xlu0 %286
      %288 = vrot.lane.b32.xlu0 %v248, 4
      %v289 = vpop.permute.xlu0 %288
      %290 = vrot.lane.b32.xlu0 %v249, 4
      %v291 = vpop.permute.xlu0 %290
      %292 = vrot.lane.b32.xlu0 %v250, 4
      %v293 = vpop.permute.xlu0 %292
      %294 = vrot.lane.b32.xlu0 %v251, 4
      %v295 = vpop.permute.xlu0 %294
      %296 = vrot.lane.b32.xlu0 %v252, 4
      %v297 = vpop.permute.xlu0 %296
      %298 = vrot.lane.b32.xlu0 %v253, 4
      %v299 = vpop.permute.xlu0 %298
      %300 = vrot.lane.b32.xlu0 %v254, 4
      %v301 = vpop.permute.xlu0 %300
      %302 = vrot.lane.b32.xlu0 %v255, 4
      %v303 = vpop.permute.xlu0 %302
      %vm320 = vcmask 64544
      %321 = vst.msk [vmem:[#allocation2] sm:$0xff] %vm320, %v273
      %322 = vst.msk [vmem:[#allocation2 + $0x8] sm:$0xff] %vm320, %v275
      %323 = vst.msk [vmem:[#allocation2 + $0x10] sm:$0xff] %vm320, %v277
      %324 = vst.msk [vmem:[#allocation2 + $0x18] sm:$0xff] %vm320, %v279
      %325 = vst.msk [vmem:[#allocation2 + $0x20] sm:$0xff] %vm320, %v281
      %326 = vst.msk [vmem:[#allocation2 + $0x28] sm:$0xff] %vm320, %v283
      %327 = vst.msk [vmem:[#allocation2 + $0x30] sm:$0xff] %vm320, %v285
      %328 = vst.msk [vmem:[#allocation2 + $0x38] sm:$0xff] %vm320, %v287
      %329 = vst.msk [vmem:[#allocation2 + $0x40] sm:$0xff] %vm320, %v289
      %330 = vst.msk [vmem:[#allocation2 + $0x48] sm:$0xff] %vm320, %v291
      %331 = vst.msk [vmem:[#allocation2 + $0x50] sm:$0xff] %vm320, %v293
      %332 = vst.msk [vmem:[#allocation2 + $0x58] sm:$0xff] %vm320, %v295
      %333 = vst.msk [vmem:[#allocation2 + $0x60] sm:$0xff] %vm320, %v297
      %334 = vst.msk [vmem:[#allocation2 + $0x68] sm:$0xff] %vm320, %v299
      %335 = vst.msk [vmem:[#allocation2 + $0x70] sm:$0xff] %vm320, %v301
      %336 = vst.msk [vmem:[#allocation2 + $0x78] sm:$0xff] %vm320, %v303
      %v337 = vld [vmem:[%s197 + $0x2] sm:$0xff]
      %v338 = vld [vmem:[%s197 + $0xa] sm:$0xff]
      %v339 = vld [vmem:[%s197 + $0x12] sm:$0xff]
      %v340 = vld [vmem:[%s197 + $0x1a] sm:$0xff]
      %v341 = vld [vmem:[%s197 + $0x22] sm:$0xff]
      %v342 = vld [vmem:[%s197 + $0x2a] sm:$0xff]
      %v343 = vld [vmem:[%s197 + $0x32] sm:$0xff]
      %v344 = vld [vmem:[%s197 + $0x3a] sm:$0xff]
      %v345 = vld [vmem:[%s197 + $0x42] sm:$0xff]
      %v346 = vld [vmem:[%s197 + $0x4a] sm:$0xff]
      %v347 = vld [vmem:[%s197 + $0x52] sm:$0xff]
      %v348 = vld [vmem:[%s197 + $0x5a] sm:$0xff]
      %v349 = vld [vmem:[%s197 + $0x62] sm:$0xff]
      %v350 = vld [vmem:[%s197 + $0x6a] sm:$0xff]
      %v351 = vld [vmem:[%s197 + $0x72] sm:$0xff]
      %v352 = vld [vmem:[%s197 + $0x7a] sm:$0xff]
      %369 = vrot.lane.b32.xlu0 %v337, 8
      %v370 = vpop.permute.xlu0 %369
      %371 = vrot.lane.b32.xlu0 %v338, 8
      %v372 = vpop.permute.xlu0 %371
      %373 = vrot.lane.b32.xlu0 %v339, 8
      %v374 = vpop.permute.xlu0 %373
      %375 = vrot.lane.b32.xlu0 %v340, 8
      %v376 = vpop.permute.xlu0 %375
      %377 = vrot.lane.b32.xlu0 %v341, 8
      %v378 = vpop.permute.xlu0 %377
      %379 = vrot.lane.b32.xlu0 %v342, 8
      %v380 = vpop.permute.xlu0 %379
      %381 = vrot.lane.b32.xlu0 %v343, 8
      %v382 = vpop.permute.xlu0 %381
      %383 = vrot.lane.b32.xlu0 %v344, 8
      %v384 = vpop.permute.xlu0 %383
      %385 = vrot.lane.b32.xlu0 %v345, 8
      %v386 = vpop.permute.xlu0 %385
      %387 = vrot.lane.b32.xlu0 %v346, 8
      %v388 = vpop.permute.xlu0 %387
      %389 = vrot.lane.b32.xlu0 %v347, 8
      %v390 = vpop.permute.xlu0 %389
      %391 = vrot.lane.b32.xlu0 %v348, 8
      %v392 = vpop.permute.xlu0 %391
      %393 = vrot.lane.b32.xlu0 %v349, 8
      %v394 = vpop.permute.xlu0 %393
      %395 = vrot.lane.b32.xlu0 %v350, 8
      %v396 = vpop.permute.xlu0 %395
      %397 = vrot.lane.b32.xlu0 %v351, 8
      %v398 = vpop.permute.xlu0 %397
      %399 = vrot.lane.b32.xlu0 %v352, 8
      %v400 = vpop.permute.xlu0 %399
      %vm417 = vcmask 97344
      %418 = vst.msk [vmem:[#allocation2] sm:$0xff] %vm417, %v370
      %419 = vst.msk [vmem:[#allocation2 + $0x8] sm:$0xff] %vm417, %v372
      %420 = vst.msk [vmem:[#allocation2 + $0x10] sm:$0xff] %vm417, %v374
      %421 = vst.msk [vmem:[#allocation2 + $0x18] sm:$0xff] %vm417, %v376
      %422 = vst.msk [vmem:[#allocation2 + $0x20] sm:$0xff] %vm417, %v378
      %423 = vst.msk [vmem:[#allocation2 + $0x28] sm:$0xff] %vm417, %v380
      %424 = vst.msk [vmem:[#allocation2 + $0x30] sm:$0xff] %vm417, %v382
      %425 = vst.msk [vmem:[#allocation2 + $0x38] sm:$0xff] %vm417, %v384
      %426 = vst.msk [vmem:[#allocation2 + $0x40] sm:$0xff] %vm417, %v386
      %427 = vst.msk [vmem:[#allocation2 + $0x48] sm:$0xff] %vm417, %v388
      %428 = vst.msk [vmem:[#allocation2 + $0x50] sm:$0xff] %vm417, %v390
      %429 = vst.msk [vmem:[#allocation2 + $0x58] sm:$0xff] %vm417, %v392
      %430 = vst.msk [vmem:[#allocation2 + $0x60] sm:$0xff] %vm417, %v394
      %431 = vst.msk [vmem:[#allocation2 + $0x68] sm:$0xff] %vm417, %v396
      %432 = vst.msk [vmem:[#allocation2 + $0x70] sm:$0xff] %vm417, %v398
      %433 = vst.msk [vmem:[#allocation2 + $0x78] sm:$0xff] %vm417, %v400
      %v434 = vld [vmem:[%s197 + $0x10] sm:$0xff]
      %v435 = vld [vmem:[%s197 + $0x18] sm:$0xff]
      %v436 = vld [vmem:[%s197 + $0x20] sm:$0xff]
      %v437 = vld [vmem:[%s197 + $0x28] sm:$0xff]
      %v438 = vld [vmem:[%s197 + $0x30] sm:$0xff]
      %v439 = vld [vmem:[%s197 + $0x38] sm:$0xff]
      %v440 = vld [vmem:[%s197 + $0x40] sm:$0xff]
      %v441 = vld [vmem:[%s197 + $0x48] sm:$0xff]
      %v442 = vld [vmem:[%s197 + $0x50] sm:$0xff]
      %v443 = vld [vmem:[%s197 + $0x58] sm:$0xff]
      %v444 = vld [vmem:[%s197 + $0x60] sm:$0xff]
      %v445 = vld [vmem:[%s197 + $0x68] sm:$0xff]
      %v446 = vld [vmem:[%s197 + $0x70] sm:$0xff]
      %v447 = vld [vmem:[%s197 + $0x78] sm:$0xff]
      %v448 = vld [vmem:[%s197 + $0x80] sm:$0xff]
      %v449 = vld [vmem:[%s197 + $0x88] sm:$0xff]
      %466 = vrot.lane.b32.xlu0 %v434, 12
      %v467 = vpop.permute.xlu0 %466
      %468 = vrot.lane.b32.xlu0 %v435, 12
      %v469 = vpop.permute.xlu0 %468
      %470 = vrot.lane.b32.xlu0 %v436, 12
      %v471 = vpop.permute.xlu0 %470
      %472 = vrot.lane.b32.xlu0 %v437, 12
      %v473 = vpop.permute.xlu0 %472
      %474 = vrot.lane.b32.xlu0 %v438, 12
      %v475 = vpop.permute.xlu0 %474
      %476 = vrot.lane.b32.xlu0 %v439, 12
      %v477 = vpop.permute.xlu0 %476
      %478 = vrot.lane.b32.xlu0 %v440, 12
      %v479 = vpop.permute.xlu0 %478
      %480 = vrot.lane.b32.xlu0 %v441, 12
      %v481 = vpop.permute.xlu0 %480
      %482 = vrot.lane.b32.xlu0 %v442, 12
      %v483 = vpop.permute.xlu0 %482
      %484 = vrot.lane.b32.xlu0 %v443, 12
      %v485 = vpop.permute.xlu0 %484
      %486 = vrot.lane.b32.xlu0 %v444, 12
      %v487 = vpop.permute.xlu0 %486
      %488 = vrot.lane.b32.xlu0 %v445, 12
      %v489 = vpop.permute.xlu0 %488
      %490 = vrot.lane.b32.xlu0 %v446, 12
      %v491 = vpop.permute.xlu0 %490
      %492 = vrot.lane.b32.xlu0 %v447, 12
      %v493 = vpop.permute.xlu0 %492
      %494 = vrot.lane.b32.xlu0 %v448, 12
      %v495 = vpop.permute.xlu0 %494
      %496 = vrot.lane.b32.xlu0 %v449, 12
      %v497 = vpop.permute.xlu0 %496
      %vm514 = vcmask 130144
      %515 = vst.msk [vmem:[#allocation2] sm:$0xff] %vm514, %v467
      %516 = vst.msk [vmem:[#allocation2 + $0x8] sm:$0xff] %vm514, %v469
      %517 = vst.msk [vmem:[#allocation2 + $0x10] sm:$0xff] %vm514, %v471
      %518 = vst.msk [vmem:[#allocation2 + $0x18] sm:$0xff] %vm514, %v473
      %519 = vst.msk [vmem:[#allocation2 + $0x20] sm:$0xff] %vm514, %v475
      %520 = vst.msk [vmem:[#allocation2 + $0x28] sm:$0xff] %vm514, %v477
      %521 = vst.msk [vmem:[#allocation2 + $0x30] sm:$0xff] %vm514, %v479
      %522 = vst.msk [vmem:[#allocation2 + $0x38] sm:$0xff] %vm514, %v481
      %523 = vst.msk [vmem:[#allocation2 + $0x40] sm:$0xff] %vm514, %v483
      %524 = vst.msk [vmem:[#allocation2 + $0x48] sm:$0xff] %vm514, %v485
      %525 = vst.msk [vmem:[#allocation2 + $0x50] sm:$0xff] %vm514, %v487
      %526 = vst.msk [vmem:[#allocation2 + $0x58] sm:$0xff] %vm514, %v489
      %527 = vst.msk [vmem:[#allocation2 + $0x60] sm:$0xff] %vm514, %v491
      %528 = vst.msk [vmem:[#allocation2 + $0x68] sm:$0xff] %vm514, %v493
      %529 = vst.msk [vmem:[#allocation2 + $0x70] sm:$0xff] %vm514, %v495
      %530 = vst.msk [vmem:[#allocation2 + $0x78] sm:$0xff] %vm514, %v497
      %v531 = vld [vmem:[%s197 + $0x11] sm:$0xff]
      %v532 = vld [vmem:[%s197 + $0x19] sm:$0xff]
      %v533 = vld [vmem:[%s197 + $0x21] sm:$0xff]
      %v534 = vld [vmem:[%s197 + $0x29] sm:$0xff]
      %v535 = vld [vmem:[%s197 + $0x31] sm:$0xff]
      %v536 = vld [vmem:[%s197 + $0x39] sm:$0xff]
      %v537 = vld [vmem:[%s197 + $0x41] sm:$0xff]
      %v538 = vld [vmem:[%s197 + $0x49] sm:$0xff]
      %v539 = vld [vmem:[%s197 + $0x51] sm:$0xff]
      %v540 = vld [vmem:[%s197 + $0x59] sm:$0xff]
      %v541 = vld [vmem:[%s197 + $0x61] sm:$0xff]
      %v542 = vld [vmem:[%s197 + $0x69] sm:$0xff]
      %v543 = vld [vmem:[%s197 + $0x71] sm:$0xff]
      %v544 = vld [vmem:[%s197 + $0x79] sm:$0xff]
      %v545 = vld [vmem:[%s197 + $0x81] sm:$0xff]
      %v546 = vld [vmem:[%s197 + $0x89] sm:$0xff]
      %563 = vrot.lane.b32.xlu0 %v531, 16
      %v564 = vpop.permute.xlu0 %563
      %565 = vrot.lane.b32.xlu0 %v532, 16
      %v566 = vpop.permute.xlu0 %565
      %567 = vrot.lane.b32.xlu0 %v533, 16
      %v568 = vpop.permute.xlu0 %567
      %569 = vrot.lane.b32.xlu0 %v534, 16
      %v570 = vpop.permute.xlu0 %569
      %571 = vrot.lane.b32.xlu0 %v535, 16
      %v572 = vpop.permute.xlu0 %571
      %573 = vrot.lane.b32.xlu0 %v536, 16
      %v574 = vpop.permute.xlu0 %573
      %575 = vrot.lane.b32.xlu0 %v537, 16
      %v576 = vpop.permute.xlu0 %575
      %577 = vrot.lane.b32.xlu0 %v538, 16
      %v578 = vpop.permute.xlu0 %577
      %579 = vrot.lane.b32.xlu0 %v539, 16
      %v580 = vpop.permute.xlu0 %579
      %581 = vrot.lane.b32.xlu0 %v540, 16
      %v582 = vpop.permute.xlu0 %581
      %583 = vrot.lane.b32.xlu0 %v541, 16
      %v584 = vpop.permute.xlu0 %583
      %585 = vrot.lane.b32.xlu0 %v542, 16
      %v586 = vpop.permute.xlu0 %585
      %587 = vrot.lane.b32.xlu0 %v543, 16
      %v588 = vpop.permute.xlu0 %587
      %589 = vrot.lane.b32.xlu0 %v544, 16
      %v590 = vpop.permute.xlu0 %589
      %591 = vrot.lane.b32.xlu0 %v545, 16
      %v592 = vpop.permute.xlu0 %591
      %593 = vrot.lane.b32.xlu0 %v546, 16
      %v594 = vpop.permute.xlu0 %593
      %vm611 = vcmask 162944
      %612 = vst.msk [vmem:[#allocation2] sm:$0xff] %vm611, %v564
      %613 = vst.msk [vmem:[#allocation2 + $0x8] sm:$0xff] %vm611, %v566
      %614 = vst.msk [vmem:[#allocation2 + $0x10] sm:$0xff] %vm611, %v568
      %615 = vst.msk [vmem:[#allocation2 + $0x18] sm:$0xff] %vm611, %v570
      %616 = vst.msk [vmem:[#allocation2 + $0x20] sm:$0xff] %vm611, %v572
      %617 = vst.msk [vmem:[#allocation2 + $0x28] sm:$0xff] %vm611, %v574
      %618 = vst.msk [vmem:[#allocation2 + $0x30] sm:$0xff] %vm611, %v576
      %619 = vst.msk [vmem:[#allocation2 + $0x38] sm:$0xff] %vm611, %v578
      %620 = vst.msk [vmem:[#allocation2 + $0x40] sm:$0xff] %vm611, %v580
      %621 = vst.msk [vmem:[#allocation2 + $0x48] sm:$0xff] %vm611, %v582
      %622 = vst.msk [vmem:[#allocation2 + $0x50] sm:$0xff] %vm611, %v584
      %623 = vst.msk [vmem:[#allocation2 + $0x58] sm:$0xff] %vm611, %v586
      %624 = vst.msk [vmem:[#allocation2 + $0x60] sm:$0xff] %vm611, %v588
      %625 = vst.msk [vmem:[#allocation2 + $0x68] sm:$0xff] %vm611, %v590
      %626 = vst.msk [vmem:[#allocation2 + $0x70] sm:$0xff] %vm611, %v592
      %627 = vst.msk [vmem:[#allocation2 + $0x78] sm:$0xff] %vm611, %v594
      %v628 = vld [vmem:[%s197 + $0x12] sm:$0xff]
      %v629 = vld [vmem:[%s197 + $0x1a] sm:$0xff]
      %v630 = vld [vmem:[%s197 + $0x22] sm:$0xff]
      %v631 = vld [vmem:[%s197 + $0x2a] sm:$0xff]
      %v632 = vld [vmem:[%s197 + $0x32] sm:$0xff]
      %v633 = vld [vmem:[%s197 + $0x3a] sm:$0xff]
      %v634 = vld [vmem:[%s197 + $0x42] sm:$0xff]
      %v635 = vld [vmem:[%s197 + $0x4a] sm:$0xff]
      %v636 = vld [vmem:[%s197 + $0x52] sm:$0xff]
      %v637 = vld [vmem:[%s197 + $0x5a] sm:$0xff]
      %v638 = vld [vmem:[%s197 + $0x62] sm:$0xff]
      %v639 = vld [vmem:[%s197 + $0x6a] sm:$0xff]
      %v640 = vld [vmem:[%s197 + $0x72] sm:$0xff]
      %v641 = vld [vmem:[%s197 + $0x7a] sm:$0xff]
      %v642 = vld [vmem:[%s197 + $0x82] sm:$0xff]
      %v643 = vld [vmem:[%s197 + $0x8a] sm:$0xff]
      %660 = vrot.lane.b32.xlu0 %v628, 20
      %v661 = vpop.permute.xlu0 %660
      %662 = vrot.lane.b32.xlu0 %v629, 20
      %v663 = vpop.permute.xlu0 %662
      %664 = vrot.lane.b32.xlu0 %v630, 20
      %v665 = vpop.permute.xlu0 %664
      %666 = vrot.lane.b32.xlu0 %v631, 20
      %v667 = vpop.permute.xlu0 %666
      %668 = vrot.lane.b32.xlu0 %v632, 20
      %v669 = vpop.permute.xlu0 %668
      %670 = vrot.lane.b32.xlu0 %v633, 20
      %v671 = vpop.permute.xlu0 %670
      %672 = vrot.lane.b32.xlu0 %v634, 20
      %v673 = vpop.permute.xlu0 %672
      %674 = vrot.lane.b32.xlu0 %v635, 20
      %v675 = vpop.permute.xlu0 %674
      %676 = vrot.lane.b32.xlu0 %v636, 20
      %v677 = vpop.permute.xlu0 %676
      %678 = vrot.lane.b32.xlu0 %v637, 20
      %v679 = vpop.permute.xlu0 %678
      %680 = vrot.lane.b32.xlu0 %v638, 20
      %v681 = vpop.permute.xlu0 %680
      %682 = vrot.lane.b32.xlu0 %v639, 20
      %v683 = vpop.permute.xlu0 %682
      %684 = vrot.lane.b32.xlu0 %v640, 20
      %v685 = vpop.permute.xlu0 %684
      %686 = vrot.lane.b32.xlu0 %v641, 20
      %v687 = vpop.permute.xlu0 %686
      %688 = vrot.lane.b32.xlu0 %v642, 20
      %v689 = vpop.permute.xlu0 %688
      %690 = vrot.lane.b32.xlu0 %v643, 20
      %v691 = vpop.permute.xlu0 %690
      %vm708 = vcmask 195744
      %709 = vst.msk [vmem:[#allocation2] sm:$0xff] %vm708, %v661
      %710 = vst.msk [vmem:[#allocation2 + $0x8] sm:$0xff] %vm708, %v663
      %711 = vst.msk [vmem:[#allocation2 + $0x10] sm:$0xff] %vm708, %v665
      %712 = vst.msk [vmem:[#allocation2 + $0x18] sm:$0xff] %vm708, %v667
      %713 = vst.msk [vmem:[#allocation2 + $0x20] sm:$0xff] %vm708, %v669
      %714 = vst.msk [vmem:[#allocation2 + $0x28] sm:$0xff] %vm708, %v671
      %715 = vst.msk [vmem:[#allocation2 + $0x30] sm:$0xff] %vm708, %v673
      %716 = vst.msk [vmem:[#allocation2 + $0x38] sm:$0xff] %vm708, %v675
      %717 = vst.msk [vmem:[#allocation2 + $0x40] sm:$0xff] %vm708, %v677
      %718 = vst.msk [vmem:[#allocation2 + $0x48] sm:$0xff] %vm708, %v679
      %719 = vst.msk [vmem:[#allocation2 + $0x50] sm:$0xff] %vm708, %v681
      %720 = vst.msk [vmem:[#allocation2 + $0x58] sm:$0xff] %vm708, %v683
      %721 = vst.msk [vmem:[#allocation2 + $0x60] sm:$0xff] %vm708, %v685
      %722 = vst.msk [vmem:[#allocation2 + $0x68] sm:$0xff] %vm708, %v687
      %723 = vst.msk [vmem:[#allocation2 + $0x70] sm:$0xff] %vm708, %v689
      %724 = vst.msk [vmem:[#allocation2 + $0x78] sm:$0xff] %vm708, %v691
      %v725 = vld [vmem:[%s197 + $0x20] sm:$0xff]
      %v726 = vld [vmem:[%s197 + $0x28] sm:$0xff]
      %v727 = vld [vmem:[%s197 + $0x30] sm:$0xff]
      %v728 = vld [vmem:[%s197 + $0x38] sm:$0xff]
      %v729 = vld [vmem:[%s197 + $0x40] sm:$0xff]
      %v730 = vld [vmem:[%s197 + $0x48] sm:$0xff]
      %v731 = vld [vmem:[%s197 + $0x50] sm:$0xff]
      %v732 = vld [vmem:[%s197 + $0x58] sm:$0xff]
      %v733 = vld [vmem:[%s197 + $0x60] sm:$0xff]
      %v734 = vld [vmem:[%s197 + $0x68] sm:$0xff]
      %v735 = vld [vmem:[%s197 + $0x70] sm:$0xff]
      %v736 = vld [vmem:[%s197 + $0x78] sm:$0xff]
      %v737 = vld [vmem:[%s197 + $0x80] sm:$0xff]
      %v738 = vld [vmem:[%s197 + $0x88] sm:$0xff]
      %v739 = vld [vmem:[%s197 + $0x90] sm:$0xff]
      %v740 = vld [vmem:[%s197 + $0x98] sm:$0xff]
      %757 = vrot.lane.b32.xlu0 %v725, 24
      %v758 = vpop.permute.xlu0 %757
      %759 = vrot.lane.b32.xlu0 %v726, 24
      %v760 = vpop.permute.xlu0 %759
      %761 = vrot.lane.b32.xlu0 %v727, 24
      %v762 = vpop.permute.xlu0 %761
      %763 = vrot.lane.b32.xlu0 %v728, 24
      %v764 = vpop.permute.xlu0 %763
      %765 = vrot.lane.b32.xlu0 %v729, 24
      %v766 = vpop.permute.xlu0 %765
      %767 = vrot.lane.b32.xlu0 %v730, 24
      %v768 = vpop.permute.xlu0 %767
      %769 = vrot.lane.b32.xlu0 %v731, 24
      %v770 = vpop.permute.xlu0 %769
      %771 = vrot.lane.b32.xlu0 %v732, 24
      %v772 = vpop.permute.xlu0 %771
      %773 = vrot.lane.b32.xlu0 %v733, 24
      %v774 = vpop.permute.xlu0 %773
      %775 = vrot.lane.b32.xlu0 %v734, 24
      %v776 = vpop.permute.xlu0 %775
      %777 = vrot.lane.b32.xlu0 %v735, 24
      %v778 = vpop.permute.xlu0 %777
      %779 = vrot.lane.b32.xlu0 %v736, 24
      %v780 = vpop.permute.xlu0 %779
      %781 = vrot.lane.b32.xlu0 %v737, 24
      %v782 = vpop.permute.xlu0 %781
      %783 = vrot.lane.b32.xlu0 %v738, 24
      %v784 = vpop.permute.xlu0 %783
      %785 = vrot.lane.b32.xlu0 %v739, 24
      %v786 = vpop.permute.xlu0 %785
      %787 = vrot.lane.b32.xlu0 %v740, 24
      %v788 = vpop.permute.xlu0 %787
      %vm805 = vcmask 228544
      %806 = vst.msk [vmem:[#allocation2] sm:$0xff] %vm805, %v758
      %807 = vst.msk [vmem:[#allocation2 + $0x8] sm:$0xff] %vm805, %v760
      %808 = vst.msk [vmem:[#allocation2 + $0x10] sm:$0xff] %vm805, %v762
      %809 = vst.msk [vmem:[#allocation2 + $0x18] sm:$0xff] %vm805, %v764
      %810 = vst.msk [vmem:[#allocation2 + $0x20] sm:$0xff] %vm805, %v766
      %811 = vst.msk [vmem:[#allocation2 + $0x28] sm:$0xff] %vm805, %v768
      %812 = vst.msk [vmem:[#allocation2 + $0x30] sm:$0xff] %vm805, %v770
      %813 = vst.msk [vmem:[#allocation2 + $0x38] sm:$0xff] %vm805, %v772
      %814 = vst.msk [vmem:[#allocation2 + $0x40] sm:$0xff] %vm805, %v774
      %815 = vst.msk [vmem:[#allocation2 + $0x48] sm:$0xff] %vm805, %v776
      %816 = vst.msk [vmem:[#allocation2 + $0x50] sm:$0xff] %vm805, %v778
      %817 = vst.msk [vmem:[#allocation2 + $0x58] sm:$0xff] %vm805, %v780
      %818 = vst.msk [vmem:[#allocation2 + $0x60] sm:$0xff] %vm805, %v782
      %819 = vst.msk [vmem:[#allocation2 + $0x68] sm:$0xff] %vm805, %v784
      %820 = vst.msk [vmem:[#allocation2 + $0x70] sm:$0xff] %vm805, %v786
      %821 = vst.msk [vmem:[#allocation2 + $0x78] sm:$0xff] %vm805, %v788
      %v822 = vld [vmem:[%s197 + $0x21] sm:$0xff]
      %v823 = vld [vmem:[%s197 + $0x29] sm:$0xff]
      %v824 = vld [vmem:[%s197 + $0x31] sm:$0xff]
      %v825 = vld [vmem:[%s197 + $0x39] sm:$0xff]
      %v826 = vld [vmem:[%s197 + $0x41] sm:$0xff]
      %v827 = vld [vmem:[%s197 + $0x49] sm:$0xff]
      %v828 = vld [vmem:[%s197 + $0x51] sm:$0xff]
      %v829 = vld [vmem:[%s197 + $0x59] sm:$0xff]
      %v830 = vld [vmem:[%s197 + $0x61] sm:$0xff]
      %v831 = vld [vmem:[%s197 + $0x69] sm:$0xff]
      %v832 = vld [vmem:[%s197 + $0x71] sm:$0xff]
      %v833 = vld [vmem:[%s197 + $0x79] sm:$0xff]
      %v834 = vld [vmem:[%s197 + $0x81] sm:$0xff]
      %v835 = vld [vmem:[%s197 + $0x89] sm:$0xff]
      %v836 = vld [vmem:[%s197 + $0x91] sm:$0xff]
      %v837 = vld [vmem:[%s197 + $0x99] sm:$0xff]
      %854 = vrot.lane.b32.xlu0 %v822, 28
      %v855 = vpop.permute.xlu0 %854
      %856 = vrot.lane.b32.xlu0 %v823, 28
      %v857 = vpop.permute.xlu0 %856
      %858 = vrot.lane.b32.xlu0 %v824, 28
      %v859 = vpop.permute.xlu0 %858
      %860 = vrot.lane.b32.xlu0 %v825, 28
      %v861 = vpop.permute.xlu0 %860
      %862 = vrot.lane.b32.xlu0 %v826, 28
      %v863 = vpop.permute.xlu0 %862
      %864 = vrot.lane.b32.xlu0 %v827, 28
      %v865 = vpop.permute.xlu0 %864
      %866 = vrot.lane.b32.xlu0 %v828, 28
      %v867 = vpop.permute.xlu0 %866
      %868 = vrot.lane.b32.xlu0 %v829, 28
      %v869 = vpop.permute.xlu0 %868
      %870 = vrot.lane.b32.xlu0 %v830, 28
      %v871 = vpop.permute.xlu0 %870
      %872 = vrot.lane.b32.xlu0 %v831, 28
      %v873 = vpop.permute.xlu0 %872
      %874 = vrot.lane.b32.xlu0 %v832, 28
      %v875 = vpop.permute.xlu0 %874
      %876 = vrot.lane.b32.xlu0 %v833, 28
      %v877 = vpop.permute.xlu0 %876
      %878 = vrot.lane.b32.xlu0 %v834, 28
      %v879 = vpop.permute.xlu0 %878
      %880 = vrot.lane.b32.xlu0 %v835, 28
      %v881 = vpop.permute.xlu0 %880
      %882 = vrot.lane.b32.xlu0 %v836, 28
      %v883 = vpop.permute.xlu0 %882
      %884 = vrot.lane.b32.xlu0 %v837, 28
      %v885 = vpop.permute.xlu0 %884
      %vm902 = vcmask 261344
      %903 = vst.msk [vmem:[#allocation2] sm:$0xff] %vm902, %v855
      %904 = vst.msk [vmem:[#allocation2 + $0x8] sm:$0xff] %vm902, %v857
      %905 = vst.msk [vmem:[#allocation2 + $0x10] sm:$0xff] %vm902, %v859
      %906 = vst.msk [vmem:[#allocation2 + $0x18] sm:$0xff] %vm902, %v861
      %907 = vst.msk [vmem:[#allocation2 + $0x20] sm:$0xff] %vm902, %v863
      %908 = vst.msk [vmem:[#allocation2 + $0x28] sm:$0xff] %vm902, %v865
      %909 = vst.msk [vmem:[#allocation2 + $0x30] sm:$0xff] %vm902, %v867
      %910 = vst.msk [vmem:[#allocation2 + $0x38] sm:$0xff] %vm902, %v869
      %911 = vst.msk [vmem:[#allocation2 + $0x40] sm:$0xff] %vm902, %v871
      %912 = vst.msk [vmem:[#allocation2 + $0x48] sm:$0xff] %vm902, %v873
      %913 = vst.msk [vmem:[#allocation2 + $0x50] sm:$0xff] %vm902, %v875
      %914 = vst.msk [vmem:[#allocation2 + $0x58] sm:$0xff] %vm902, %v877
      %915 = vst.msk [vmem:[#allocation2 + $0x60] sm:$0xff] %vm902, %v879
      %916 = vst.msk [vmem:[#allocation2 + $0x68] sm:$0xff] %vm902, %v881
      %917 = vst.msk [vmem:[#allocation2 + $0x70] sm:$0xff] %vm902, %v883
      %918 = vst.msk [vmem:[#allocation2 + $0x78] sm:$0xff] %vm902, %v885
      %v919 = vld [vmem:[%s197 + $0x22] sm:$0xff]
      %v920 = vld [vmem:[%s197 + $0x2a] sm:$0xff]
      %v921 = vld [vmem:[%s197 + $0x32] sm:$0xff]
      %v922 = vld [vmem:[%s197 + $0x3a] sm:$0xff]
      %v923 = vld [vmem:[%s197 + $0x42] sm:$0xff]
      %v924 = vld [vmem:[%s197 + $0x4a] sm:$0xff]
      %v925 = vld [vmem:[%s197 + $0x52] sm:$0xff]
      %v926 = vld [vmem:[%s197 + $0x5a] sm:$0xff]
      %v927 = vld [vmem:[%s197 + $0x62] sm:$0xff]
      %v928 = vld [vmem:[%s197 + $0x6a] sm:$0xff]
      %v929 = vld [vmem:[%s197 + $0x72] sm:$0xff]
      %v930 = vld [vmem:[%s197 + $0x7a] sm:$0xff]
      %v931 = vld [vmem:[%s197 + $0x82] sm:$0xff]
      %v932 = vld [vmem:[%s197 + $0x8a] sm:$0xff]
      %v933 = vld [vmem:[%s197 + $0x92] sm:$0xff]
      %v934 = vld [vmem:[%s197 + $0x9a] sm:$0xff]
      %951 = vrot.lane.b32.xlu0 %v919, 32
      %v952 = vpop.permute.xlu0 %951
      %953 = vrot.lane.b32.xlu0 %v920, 32
      %v954 = vpop.permute.xlu0 %953
      %955 = vrot.lane.b32.xlu0 %v921, 32
      %v956 = vpop.permute.xlu0 %955
      %957 = vrot.lane.b32.xlu0 %v922, 32
      %v958 = vpop.permute.xlu0 %957
      %959 = vrot.lane.b32.xlu0 %v923, 32
      %v960 = vpop.permute.xlu0 %959
      %961 = vrot.lane.b32.xlu0 %v924, 32
      %v962 = vpop.permute.xlu0 %961
      %963 = vrot.lane.b32.xlu0 %v925, 32
      %v964 = vpop.permute.xlu0 %963
      %965 = vrot.lane.b32.xlu0 %v926, 32
      %v966 = vpop.permute.xlu0 %965
      %967 = vrot.lane.b32.xlu0 %v927, 32
      %v968 = vpop.permute.xlu0 %967
      %969 = vrot.lane.b32.xlu0 %v928, 32
      %v970 = vpop.permute.xlu0 %969
      %971 = vrot.lane.b32.xlu0 %v929, 32
      %v972 = vpop.permute.xlu0 %971
      %973 = vrot.lane.b32.xlu0 %v930, 32
      %v974 = vpop.permute.xlu0 %973
      %975 = vrot.lane.b32.xlu0 %v931, 32
      %v976 = vpop.permute.xlu0 %975
      %977 = vrot.lane.b32.xlu0 %v932, 32
      %v978 = vpop.permute.xlu0 %977
      %979 = vrot.lane.b32.xlu0 %v933, 32
      %v980 = vpop.permute.xlu0 %979
      %981 = vrot.lane.b32.xlu0 %v934, 32
      %v982 = vpop.permute.xlu0 %981
      %vm999 = vcmask 294144
      %1000 = vst.msk [vmem:[#allocation2] sm:$0xff] %vm999, %v952
      %1001 = vst.msk [vmem:[#allocation2 + $0x8] sm:$0xff] %vm999, %v954
      %1002 = vst.msk [vmem:[#allocation2 + $0x10] sm:$0xff] %vm999, %v956
      %1003 = vst.msk [vmem:[#allocation2 + $0x18] sm:$0xff] %vm999, %v958
      %1004 = vst.msk [vmem:[#allocation2 + $0x20] sm:$0xff] %vm999, %v960
      %1005 = vst.msk [vmem:[#allocation2 + $0x28] sm:$0xff] %vm999, %v962
      %1006 = vst.msk [vmem:[#allocation2 + $0x30] sm:$0xff] %vm999, %v964
      %1007 = vst.msk [vmem:[#allocation2 + $0x38] sm:$0xff] %vm999, %v966
      %1008 = vst.msk [vmem:[#allocation2 + $0x40] sm:$0xff] %vm999, %v968
      %1009 = vst.msk [vmem:[#allocation2 + $0x48] sm:$0xff] %vm999, %v970
      %1010 = vst.msk [vmem:[#allocation2 + $0x50] sm:$0xff] %vm999, %v972
      %1011 = vst.msk [vmem:[#allocation2 + $0x58] sm:$0xff] %vm999, %v974
      %1012 = vst.msk [vmem:[#allocation2 + $0x60] sm:$0xff] %vm999, %v976
      %1013 = vst.msk [vmem:[#allocation2 + $0x68] sm:$0xff] %vm999, %v978
      %1014 = vst.msk [vmem:[#allocation2 + $0x70] sm:$0xff] %vm999, %v980
      %1015 = vst.msk [vmem:[#allocation2 + $0x78] sm:$0xff] %vm999, %v982
      %v1016 = vld [vmem:[#allocation2] sm:$0xff]
      %v1017 = vld [vmem:[#allocation2 + $0x8] sm:$0xff]
      %v1018 = vld [vmem:[#allocation2 + $0x10] sm:$0xff]
      %v1019 = vld [vmem:[#allocation2 + $0x18] sm:$0xff]
      %v1020 = vld [vmem:[#allocation2 + $0x20] sm:$0xff]
      %v1021 = vld [vmem:[#allocation2 + $0x28] sm:$0xff]
      %v1022 = vld [vmem:[#allocation2 + $0x30] sm:$0xff]
      %v1023 = vld [vmem:[#allocation2 + $0x38] sm:$0xff]
      %v1024 = vld [vmem:[#allocation2 + $0x40] sm:$0xff]
      %v1025 = vld [vmem:[#allocation2 + $0x48] sm:$0xff]
      %v1026 = vld [vmem:[#allocation2 + $0x50] sm:$0xff]
      %v1027 = vld [vmem:[#allocation2 + $0x58] sm:$0xff]
      %v1028 = vld [vmem:[#allocation2 + $0x60] sm:$0xff]
      %v1029 = vld [vmem:[#allocation2 + $0x68] sm:$0xff]
      %v1030 = vld [vmem:[#allocation2 + $0x70] sm:$0xff]
      %v1031 = vld [vmem:[#allocation2 + $0x78] sm:$0xff]
      %v1032 = vld [vmem:[%s1] sm:$0xff]
      %v1033 = vld [vmem:[%s1 + $0x8] sm:$0xff]
      %v1034 = vld [vmem:[%s1 + $0x10] sm:$0xff]
      %v1035 = vld [vmem:[%s1 + $0x18] sm:$0xff]
      %v1036 = vld [vmem:[%s1 + $0x20] sm:$0xf]
      %v1037 = vld [vmem:[%s2] sm:$0x1]
      %v1039 = vperm.slane %v1037, 0
      %vm1041 = vcmask 293888
      %v1043 = vsel %vm1041, %v1016, 0
      %v1046 = vsel %vm1041, %v1017, 0
      %v1049 = vsel %vm1041, %v1018, 0
      %v1052 = vsel %vm1041, %v1019, 0
      %v1055 = vsel %vm1041, %v1020, 0
      %v1058 = vsel %vm1041, %v1021, 0
      %v1061 = vsel %vm1041, %v1022, 0
      %v1064 = vsel %vm1041, %v1023, 0
      %v1067 = vsel %vm1041, %v1024, 0
      %v1070 = vsel %vm1041, %v1025, 0
      %v1073 = vsel %vm1041, %v1026, 0
      %v1076 = vsel %vm1041, %v1027, 0
      %v1079 = vsel %vm1041, %v1028, 0
      %v1082 = vsel %vm1041, %v1029, 0
      %v1085 = vsel %vm1041, %v1030, 0
      %v1088 = vsel %vm1041, %v1031, 0
      %vm1090 = vcmask 1043456
      %v1092 = vsel %vm1090, %v1036, 0
      %1094 = vmatpush.msra.mxu0 0.0
      %1095 = vmatpush.msra.mxu0 0.0
      %1096 = vmatpush.msra.mxu0 0.0
      %1097 = vmatpush.msra.mxu0 0.0
      %1098 = vmatpush.msra.mxu0 0.0
      %1099 = vmatpush.msra.mxu0 0.0
      %1100 = vmatpush.msra.mxu0 0.0
      %1101 = vmatpush.msra.mxu0 0.0
      %1102 = vmatpush.msra.mxu0 0.0
      %1103 = vmatpush.msra.mxu0 0.0
      %1104 = vmatpush.msra.mxu0 0.0
      %1105 = vmatpush.msra.mxu0 %v1092
      %1106 = vmatpush.msra.mxu0 %v1035
      %1107 = vmatpush.msra.mxu0 %v1034
      %1108 = vmatpush.msra.mxu0 %v1033
      %1109 = vmatpush.msra.mxu0 %v1032
      %1110 = vmatmul.f32.gmra.mxu0 %v1043
      %v1111 = vpop.f32.mrf.mxu0
      %v1112 = vadd.f32 %v1039, %v1111
      %1113 = vmatmul.f32.gmra.mxu0 %v1046
      %v1114 = vpop.f32.mrf.mxu0
      %v1115 = vadd.f32 %v1039, %v1114
      %1116 = vmatmul.f32.gmra.mxu0 %v1049
      %v1117 = vpop.f32.mrf.mxu0
      %v1118 = vadd.f32 %v1039, %v1117
      %1119 = vmatmul.f32.gmra.mxu0 %v1052
      %v1120 = vpop.f32.mrf.mxu0
      %v1121 = vadd.f32 %v1039, %v1120
      %1122 = vmatmul.f32.gmra.mxu0 %v1055
      %v1123 = vpop.f32.mrf.mxu0
      %v1124 = vadd.f32 %v1039, %v1123
      %1125 = vmatmul.f32.gmra.mxu0 %v1058
      %v1126 = vpop.f32.mrf.mxu0
      %v1127 = vadd.f32 %v1039, %v1126
      %1128 = vmatmul.f32.gmra.mxu0 %v1061
      %v1129 = vpop.f32.mrf.mxu0
      %v1130 = vadd.f32 %v1039, %v1129
      %1131 = vmatmul.f32.gmra.mxu0 %v1064
      %v1132 = vpop.f32.mrf.mxu0
      %v1133 = vadd.f32 %v1039, %v1132
      %1134 = vmatmul.f32.gmra.mxu0 %v1067
      %v1135 = vpop.f32.mrf.mxu0
      %v1136 = vadd.f32 %v1039, %v1135
      %1137 = vmatmul.f32.gmra.mxu0 %v1070
      %v1138 = vpop.f32.mrf.mxu0
      %v1139 = vadd.f32 %v1039, %v1138
      %1140 = vmatmul.f32.gmra.mxu0 %v1073
      %v1141 = vpop.f32.mrf.mxu0
      %v1142 = vadd.f32 %v1039, %v1141
      %1143 = vmatmul.f32.gmra.mxu0 %v1076
      %v1144 = vpop.f32.mrf.mxu0
      %v1145 = vadd.f32 %v1039, %v1144
      %1146 = vmatmul.f32.gmra.mxu0 %v1079
      %v1147 = vpop.f32.mrf.mxu0
      %v1148 = vadd.f32 %v1039, %v1147
      %1149 = vmatmul.f32.gmra.mxu0 %v1082
      %v1150 = vpop.f32.mrf.mxu0
      %v1151 = vadd.f32 %v1039, %v1150
      %1152 = vmatmul.f32.gmra.mxu0 %v1085
      %v1153 = vpop.f32.mrf.mxu0
      %v1154 = vadd.f32 %v1039, %v1153
      %1155 = vmatmul.f32.gmra.mxu0 %v1088
      %v1156 = vpop.f32.mrf.mxu0
      %v1157 = vadd.f32 %v1039, %v1156
      %1158 = vdwg.mxu0
      %v1159 = vsub.f32 0.0, %v1112
      %v1160 = vsub.f32 0.0, %v1115
      %v1161 = vsub.f32 0.0, %v1118
      %v1162 = vsub.f32 0.0, %v1121
      %v1163 = vsub.f32 0.0, %v1124
      %v1164 = vsub.f32 0.0, %v1127
      %v1165 = vsub.f32 0.0, %v1130
      %v1166 = vsub.f32 0.0, %v1133
      %v1167 = vsub.f32 0.0, %v1136
      %v1168 = vsub.f32 0.0, %v1139
      %v1169 = vsub.f32 0.0, %v1142
      %v1170 = vsub.f32 0.0, %v1145
      %v1171 = vsub.f32 0.0, %v1148
      %v1172 = vsub.f32 0.0, %v1151
      %v1173 = vsub.f32 0.0, %v1154
      %v1174 = vsub.f32 0.0, %v1157
      %v1175 = vmul.f32 %v1159, 1.442695
      %v1176 = vpow.pop %v1175
      %v1177 = vmul.f32 %v1160, 1.442695
      %v1178 = vpow.pop %v1177
      %v1179 = vmul.f32 %v1161, 1.442695
      %v1180 = vpow.pop %v1179
      %v1181 = vmul.f32 %v1162, 1.442695
      %v1182 = vpow.pop %v1181
      %v1183 = vmul.f32 %v1163, 1.442695
      %v1184 = vpow.pop %v1183
      %v1185 = vmul.f32 %v1164, 1.442695
      %v1186 = vpow.pop %v1185
      %v1187 = vmul.f32 %v1165, 1.442695
      %v1188 = vpow.pop %v1187
      %v1189 = vmul.f32 %v1166, 1.442695
      %v1190 = vpow.pop %v1189
      %v1191 = vmul.f32 %v1167, 1.442695
      %v1192 = vpow.pop %v1191
      %v1193 = vmul.f32 %v1168, 1.442695
      %v1194 = vpow.pop %v1193
      %v1195 = vmul.f32 %v1169, 1.442695
      %v1196 = vpow.pop %v1195
      %v1197 = vmul.f32 %v1170, 1.442695
      %v1198 = vpow.pop %v1197
      %v1199 = vmul.f32 %v1171, 1.442695
      %v1200 = vpow.pop %v1199
      %v1201 = vmul.f32 %v1172, 1.442695
      %v1202 = vpow.pop %v1201
      %v1203 = vmul.f32 %v1173, 1.442695
      %v1204 = vpow.pop %v1203
      %v1205 = vmul.f32 %v1174, 1.442695
      %v1206 = vpow.pop %v1205
      %v1207 = vadd.f32 %v1176, 1.0
      %v1208 = vadd.f32 %v1178, 1.0
      %v1209 = vadd.f32 %v1180, 1.0
      %v1210 = vadd.f32 %v1182, 1.0
      %v1211 = vadd.f32 %v1184, 1.0
      %v1212 = vadd.f32 %v1186, 1.0
      %v1213 = vadd.f32 %v1188, 1.0
      %v1214 = vadd.f32 %v1190, 1.0
      %v1215 = vadd.f32 %v1192, 1.0
      %v1216 = vadd.f32 %v1194, 1.0
      %v1217 = vadd.f32 %v1196, 1.0
      %v1218 = vadd.f32 %v1198, 1.0
      %v1219 = vadd.f32 %v1200, 1.0
      %v1220 = vadd.f32 %v1202, 1.0
      %v1221 = vadd.f32 %v1204, 1.0
      %v1222 = vadd.f32 %v1206, 1.0
      %v1223 = vrcp.pop %v1207
      %v1224 = vmul.f32 %v1207, %v1223
      %v1225 = vsub.f32 1.0, %v1224
      %v1226 = vmul.f32 %v1223, %v1225
      %v1227 = vadd.f32 %v1223, %v1226
      %vm1228 = vweird.f32 %v1207
      %vm1229 = vweird.f32 %v1223
      %vm1230 = vmor %vm1228, %vm1229
      %v1231 = vsel %vm1230, %v1223, %v1227
      %v1232 = vand.u32 2147483647, %v1207
      %vm1233 = vcmp.eq.f32.partialorder %v1232, 8.507059e+37
      %v1234 = vand.u32 %v1207, 2147483648
      %v1235 = vor.u32 1.1754944e-38, %v1234
      %v1236 = vsel %vm1233, %v1235, %v1231
      %v1237 = vmul.f32 1.0, %v1236
      %v1238 = vrcp.pop %v1208
      %v1239 = vmul.f32 %v1208, %v1238
      %v1240 = vsub.f32 1.0, %v1239
      %v1241 = vmul.f32 %v1238, %v1240
      %v1242 = vadd.f32 %v1238, %v1241
      %vm1243 = vweird.f32 %v1208
      %vm1244 = vweird.f32 %v1238
      %vm1245 = vmor %vm1243, %vm1244
      %v1246 = vsel %vm1245, %v1238, %v1242
      %v1247 = vand.u32 2147483647, %v1208
      %vm1248 = vcmp.eq.f32.partialorder %v1247, 8.507059e+37
      %v1249 = vand.u32 %v1208, 2147483648
      %v1250 = vor.u32 1.1754944e-38, %v1249
      %v1251 = vsel %vm1248, %v1250, %v1246
      %v1252 = vmul.f32 1.0, %v1251
      %v1253 = vrcp.pop %v1209
      %v1254 = vmul.f32 %v1209, %v1253
      %v1255 = vsub.f32 1.0, %v1254
      %v1256 = vmul.f32 %v1253, %v1255
      %v1257 = vadd.f32 %v1253, %v1256
      %vm1258 = vweird.f32 %v1209
      %vm1259 = vweird.f32 %v1253
      %vm1260 = vmor %vm1258, %vm1259
      %v1261 = vsel %vm1260, %v1253, %v1257
      %v1262 = vand.u32 2147483647, %v1209
      %vm1263 = vcmp.eq.f32.partialorder %v1262, 8.507059e+37
      %v1264 = vand.u32 %v1209, 2147483648
      %v1265 = vor.u32 1.1754944e-38, %v1264
      %v1266 = vsel %vm1263, %v1265, %v1261
      %v1267 = vmul.f32 1.0, %v1266
      %v1268 = vrcp.pop %v1210
      %v1269 = vmul.f32 %v1210, %v1268
      %v1270 = vsub.f32 1.0, %v1269
      %v1271 = vmul.f32 %v1268, %v1270
      %v1272 = vadd.f32 %v1268, %v1271
      %vm1273 = vweird.f32 %v1210
      %vm1274 = vweird.f32 %v1268
      %vm1275 = vmor %vm1273, %vm1274
      %v1276 = vsel %vm1275, %v1268, %v1272
      %v1277 = vand.u32 2147483647, %v1210
      %vm1278 = vcmp.eq.f32.partialorder %v1277, 8.507059e+37
      %v1279 = vand.u32 %v1210, 2147483648
      %v1280 = vor.u32 1.1754944e-38, %v1279
      %v1281 = vsel %vm1278, %v1280, %v1276
      %v1282 = vmul.f32 1.0, %v1281
      %v1283 = vrcp.pop %v1211
      %v1284 = vmul.f32 %v1211, %v1283
      %v1285 = vsub.f32 1.0, %v1284
      %v1286 = vmul.f32 %v1283, %v1285
      %v1287 = vadd.f32 %v1283, %v1286
      %vm1288 = vweird.f32 %v1211
      %vm1289 = vweird.f32 %v1283
      %vm1290 = vmor %vm1288, %vm1289
      %v1291 = vsel %vm1290, %v1283, %v1287
      %v1292 = vand.u32 2147483647, %v1211
      %vm1293 = vcmp.eq.f32.partialorder %v1292, 8.507059e+37
      %v1294 = vand.u32 %v1211, 2147483648
      %v1295 = vor.u32 1.1754944e-38, %v1294
      %v1296 = vsel %vm1293, %v1295, %v1291
      %v1297 = vmul.f32 1.0, %v1296
      %v1298 = vrcp.pop %v1212
      %v1299 = vmul.f32 %v1212, %v1298
      %v1300 = vsub.f32 1.0, %v1299
      %v1301 = vmul.f32 %v1298, %v1300
      %v1302 = vadd.f32 %v1298, %v1301
      %vm1303 = vweird.f32 %v1212
      %vm1304 = vweird.f32 %v1298
      %vm1305 = vmor %vm1303, %vm1304
      %v1306 = vsel %vm1305, %v1298, %v1302
      %v1307 = vand.u32 2147483647, %v1212
      %vm1308 = vcmp.eq.f32.partialorder %v1307, 8.507059e+37
      %v1309 = vand.u32 %v1212, 2147483648
      %v1310 = vor.u32 1.1754944e-38, %v1309
      %v1311 = vsel %vm1308, %v1310, %v1306
      %v1312 = vmul.f32 1.0, %v1311
      %v1313 = vrcp.pop %v1213
      %v1314 = vmul.f32 %v1213, %v1313
      %v1315 = vsub.f32 1.0, %v1314
      %v1316 = vmul.f32 %v1313, %v1315
      %v1317 = vadd.f32 %v1313, %v1316
      %vm1318 = vweird.f32 %v1213
      %vm1319 = vweird.f32 %v1313
      %vm1320 = vmor %vm1318, %vm1319
      %v1321 = vsel %vm1320, %v1313, %v1317
      %v1322 = vand.u32 2147483647, %v1213
      %vm1323 = vcmp.eq.f32.partialorder %v1322, 8.507059e+37
      %v1324 = vand.u32 %v1213, 2147483648
      %v1325 = vor.u32 1.1754944e-38, %v1324
      %v1326 = vsel %vm1323, %v1325, %v1321
      %v1327 = vmul.f32 1.0, %v1326
      %v1328 = vrcp.pop %v1214
      %v1329 = vmul.f32 %v1214, %v1328
      %v1330 = vsub.f32 1.0, %v1329
      %v1331 = vmul.f32 %v1328, %v1330
      %v1332 = vadd.f32 %v1328, %v1331
      %vm1333 = vweird.f32 %v1214
      %vm1334 = vweird.f32 %v1328
      %vm1335 = vmor %vm1333, %vm1334
      %v1336 = vsel %vm1335, %v1328, %v1332
      %v1337 = vand.u32 2147483647, %v1214
      %vm1338 = vcmp.eq.f32.partialorder %v1337, 8.507059e+37
      %v1339 = vand.u32 %v1214, 2147483648
      %v1340 = vor.u32 1.1754944e-38, %v1339
      %v1341 = vsel %vm1338, %v1340, %v1336
      %v1342 = vmul.f32 1.0, %v1341
      %v1343 = vrcp.pop %v1215
      %v1344 = vmul.f32 %v1215, %v1343
      %v1345 = vsub.f32 1.0, %v1344
      %v1346 = vmul.f32 %v1343, %v1345
      %v1347 = vadd.f32 %v1343, %v1346
      %vm1348 = vweird.f32 %v1215
      %vm1349 = vweird.f32 %v1343
      %vm1350 = vmor %vm1348, %vm1349
      %v1351 = vsel %vm1350, %v1343, %v1347
      %v1352 = vand.u32 2147483647, %v1215
      %vm1353 = vcmp.eq.f32.partialorder %v1352, 8.507059e+37
      %v1354 = vand.u32 %v1215, 2147483648
      %v1355 = vor.u32 1.1754944e-38, %v1354
      %v1356 = vsel %vm1353, %v1355, %v1351
      %v1357 = vmul.f32 1.0, %v1356
      %v1358 = vrcp.pop %v1216
      %v1359 = vmul.f32 %v1216, %v1358
      %v1360 = vsub.f32 1.0, %v1359
      %v1361 = vmul.f32 %v1358, %v1360
      %v1362 = vadd.f32 %v1358, %v1361
      %vm1363 = vweird.f32 %v1216
      %vm1364 = vweird.f32 %v1358
      %vm1365 = vmor %vm1363, %vm1364
      %v1366 = vsel %vm1365, %v1358, %v1362
      %v1367 = vand.u32 2147483647, %v1216
      %vm1368 = vcmp.eq.f32.partialorder %v1367, 8.507059e+37
      %v1369 = vand.u32 %v1216, 2147483648
      %v1370 = vor.u32 1.1754944e-38, %v1369
      %v1371 = vsel %vm1368, %v1370, %v1366
      %v1372 = vmul.f32 1.0, %v1371
      %v1373 = vrcp.pop %v1217
      %v1374 = vmul.f32 %v1217, %v1373
      %v1375 = vsub.f32 1.0, %v1374
      %v1376 = vmul.f32 %v1373, %v1375
      %v1377 = vadd.f32 %v1373, %v1376
      %vm1378 = vweird.f32 %v1217
      %vm1379 = vweird.f32 %v1373
      %vm1380 = vmor %vm1378, %vm1379
      %v1381 = vsel %vm1380, %v1373, %v1377
      %v1382 = vand.u32 2147483647, %v1217
      %vm1383 = vcmp.eq.f32.partialorder %v1382, 8.507059e+37
      %v1384 = vand.u32 %v1217, 2147483648
      %v1385 = vor.u32 1.1754944e-38, %v1384
      %v1386 = vsel %vm1383, %v1385, %v1381
      %v1387 = vmul.f32 1.0, %v1386
      %v1388 = vrcp.pop %v1218
      %v1389 = vmul.f32 %v1218, %v1388
      %v1390 = vsub.f32 1.0, %v1389
      %v1391 = vmul.f32 %v1388, %v1390
      %v1392 = vadd.f32 %v1388, %v1391
      %vm1393 = vweird.f32 %v1218
      %vm1394 = vweird.f32 %v1388
      %vm1395 = vmor %vm1393, %vm1394
      %v1396 = vsel %vm1395, %v1388, %v1392
      %v1397 = vand.u32 2147483647, %v1218
      %vm1398 = vcmp.eq.f32.partialorder %v1397, 8.507059e+37
      %v1399 = vand.u32 %v1218, 2147483648
      %v1400 = vor.u32 1.1754944e-38, %v1399
      %v1401 = vsel %vm1398, %v1400, %v1396
      %v1402 = vmul.f32 1.0, %v1401
      %v1403 = vrcp.pop %v1219
      %v1404 = vmul.f32 %v1219, %v1403
      %v1405 = vsub.f32 1.0, %v1404
      %v1406 = vmul.f32 %v1403, %v1405
      %v1407 = vadd.f32 %v1403, %v1406
      %vm1408 = vweird.f32 %v1219
      %vm1409 = vweird.f32 %v1403
      %vm1410 = vmor %vm1408, %vm1409
      %v1411 = vsel %vm1410, %v1403, %v1407
      %v1412 = vand.u32 2147483647, %v1219
      %vm1413 = vcmp.eq.f32.partialorder %v1412, 8.507059e+37
      %v1414 = vand.u32 %v1219, 2147483648
      %v1415 = vor.u32 1.1754944e-38, %v1414
      %v1416 = vsel %vm1413, %v1415, %v1411
      %v1417 = vmul.f32 1.0, %v1416
      %v1418 = vrcp.pop %v1220
      %v1419 = vmul.f32 %v1220, %v1418
      %v1420 = vsub.f32 1.0, %v1419
      %v1421 = vmul.f32 %v1418, %v1420
      %v1422 = vadd.f32 %v1418, %v1421
      %vm1423 = vweird.f32 %v1220
      %vm1424 = vweird.f32 %v1418
      %vm1425 = vmor %vm1423, %vm1424
      %v1426 = vsel %vm1425, %v1418, %v1422
      %v1427 = vand.u32 2147483647, %v1220
      %vm1428 = vcmp.eq.f32.partialorder %v1427, 8.507059e+37
      %v1429 = vand.u32 %v1220, 2147483648
      %v1430 = vor.u32 1.1754944e-38, %v1429
      %v1431 = vsel %vm1428, %v1430, %v1426
      %v1432 = vmul.f32 1.0, %v1431
      %v1433 = vrcp.pop %v1221
      %v1434 = vmul.f32 %v1221, %v1433
      %v1435 = vsub.f32 1.0, %v1434
      %v1436 = vmul.f32 %v1433, %v1435
      %v1437 = vadd.f32 %v1433, %v1436
      %vm1438 = vweird.f32 %v1221
      %vm1439 = vweird.f32 %v1433
      %vm1440 = vmor %vm1438, %vm1439
      %v1441 = vsel %vm1440, %v1433, %v1437
      %v1442 = vand.u32 2147483647, %v1221
      %vm1443 = vcmp.eq.f32.partialorder %v1442, 8.507059e+37
      %v1444 = vand.u32 %v1221, 2147483648
      %v1445 = vor.u32 1.1754944e-38, %v1444
      %v1446 = vsel %vm1443, %v1445, %v1441
      %v1447 = vmul.f32 1.0, %v1446
      %v1448 = vrcp.pop %v1222
      %v1449 = vmul.f32 %v1222, %v1448
      %v1450 = vsub.f32 1.0, %v1449
      %v1451 = vmul.f32 %v1448, %v1450
      %v1452 = vadd.f32 %v1448, %v1451
      %vm1453 = vweird.f32 %v1222
      %vm1454 = vweird.f32 %v1448
      %vm1455 = vmor %vm1453, %vm1454
      %v1456 = vsel %vm1455, %v1448, %v1452
      %v1457 = vand.u32 2147483647, %v1222
      %vm1458 = vcmp.eq.f32.partialorder %v1457, 8.507059e+37
      %v1459 = vand.u32 %v1222, 2147483648
      %v1460 = vor.u32 1.1754944e-38, %v1459
      %v1461 = vsel %vm1458, %v1460, %v1456
      %v1462 = vmul.f32 1.0, %v1461
      %vm1463 = vcmask 64512
      %1464 = vst.msk [vmem:[%s206] sm:$0xff] %vm1463, %v1237
      %1465 = vst.msk [vmem:[%s206 + $0x8] sm:$0xff] %vm1463, %v1252
      %1466 = vst.msk [vmem:[%s206 + $0x10] sm:$0xff] %vm1463, %v1267
      %1467 = vst.msk [vmem:[%s206 + $0x18] sm:$0xff] %vm1463, %v1282
      %1468 = vst.msk [vmem:[%s206 + $0x20] sm:$0xff] %vm1463, %v1297
      %1469 = vst.msk [vmem:[%s206 + $0x28] sm:$0xff] %vm1463, %v1312
      %1470 = vst.msk [vmem:[%s206 + $0x30] sm:$0xff] %vm1463, %v1327
      %1471 = vst.msk [vmem:[%s206 + $0x38] sm:$0xff] %vm1463, %v1342
      %1472 = vst.msk [vmem:[%s206 + $0x40] sm:$0xff] %vm1463, %v1357
      %1473 = vst.msk [vmem:[%s206 + $0x48] sm:$0xff] %vm1463, %v1372
      %1474 = vst.msk [vmem:[%s206 + $0x50] sm:$0xff] %vm1463, %v1387
      %1475 = vst.msk [vmem:[%s206 + $0x58] sm:$0xff] %vm1463, %v1402
      %1476 = vst.msk [vmem:[%s206 + $0x60] sm:$0xff] %vm1463, %v1417
      %1477 = vst.msk [vmem:[%s206 + $0x68] sm:$0xff] %vm1463, %v1432
      %1478 = vst.msk [vmem:[%s206 + $0x70] sm:$0xff] %vm1463, %v1447
      %1479 = vst.msk [vmem:[%s206 + $0x78] sm:$0xff] %vm1463, %v1462
      %p1480 = scmp.lt.s32.totalorder %s18, 1
      %s1481 = scalar_select %p1480, %s18, 1
      %p1482 = scmp.lt.s32.totalorder %s19, 0
      %s1483 = scalar_select %p1482, %s19, 0
      %s1484 = smul.addr %s1483, 16
      %s1485 = smul.addr %s1481, 16
      %s1486 = sadd.s32 %s1484, %s1485
      %s1487 = smul.addr %s1486, 8
      %s1488 = scalar_lea.vmem %s3, %s1487
      // Predicated region
      $region33: #{bbconv_forward.1} parent=31 // pred_check
        %p1489 = pneg %p116
      $region34: #{bbconv_forward.1} parent=31 // pred_check_branch
        %1491 = sbr.rel (%p1489) target = $region36
      $region35: #{bbconv_forward.1} parent=31 // pred_region
        _
      $region36: #{bbconv_forward.1} parent=31 // pred_fallthru
        _
    $region32: #{bbconv_forward.1} parent=5 // pred_fallthru
      _
    %p1492 = scmp.le.s32.totalorder 2, %s9
    // Predicated region
    $region37: #{bbconv_forward.1} parent=5 // pred_check
      %p1493 = pneg %p1492
    $region38: #{bbconv_forward.1} parent=5 // pred_check_branch
      %1495 = sbr.rel (%p1493) target = $region40
    $region39: #{bbconv_forward.1} parent=5 // pred_region
      %s1496 = ssub.s32 %s9, 2
      // Predicated region
      $region41: #{bbconv_forward.1} parent=39 // pred_check
        %p1497 = pneg %p122
      $region42: #{bbconv_forward.1} parent=39 // pred_check_branch
        %1499 = sbr.rel (%p1497) target = $region44
      $region43: #{bbconv_forward.1} parent=39 // pred_region
        %p1500 = scmp.lt.s32.totalorder %s20, 1
        %s1501 = scalar_select %p1500, %s20, 1
        %p1502 = scmp.lt.s32.totalorder %s21, 0
        %s1503 = scalar_select %p1502, %s21, 0
        %s1504 = smul.addr %s1503, 16
        %s1505 = smul.addr %s1501, 16
        %s1506 = sadd.s32 %s1504, %s1505
        %s1507 = smul.addr %s1506, 8
        %s1508 = scalar_lea.vmem %s3, %s1507
      $region44: #{bbconv_forward.1} parent=39 // pred_fallthru
        _
    $region40: #{bbconv_forward.1} parent=5 // pred_fallthru
      _
  $region6: #{bbconv_forward.1} parent=0 // loop_footer
    %s13 = sadd.s32 1, %s9
  $region7: #{bbconv_forward.1} parent=0 // loop_footer_branch
    %8 = sbr.rel target = $region3
  $region8: #{bbconv_forward.1} parent=0 // loop_exit
    _

</llo_original>
